<compile_context>
chip_gen: v7x
topology: tpu7x:2x2x1
jax: 0.10.0
libtpu: 0.0.40
codegen_flags: <defaults>
</compile_context>

<pallas_src>
import jax
import jax.numpy as jnp
from jax.experimental import pallas as pl
from jax.experimental.pallas import tpu as pltpu


# --------------------------------------------------------------------------
# Fused Pallas kernel: all layers, full sequence, single grid step.
# --------------------------------------------------------------------------
def _make_encoder_kernel(S, B, L, H):
    G = 4 * H

    def kernel(x_ref, wih_ref, whh_ref, b_ref, y_ref, xproj_scr):
        # Hoisted constants for the single-sigmoid gate transform:
        #   i,f,o lanes: a=1, b=0  ->  sigmoid(g)
        #   g    lanes: a=2, b=-1  ->  2*sigmoid(2*g_raw) - 1 = tanh(g_raw)
        # (g columns of the packed weights/bias were pre-scaled by 2.)
        lane = jax.lax.broadcasted_iota(jnp.int32, (B, G), 1)
        g_lane = (lane >= 2 * H) & (lane < 3 * H)
        a_vec = jnp.where(g_lane, 2.0, 1.0)
        b_vec = jnp.where(g_lane, -1.0, 0.0)

        # Layer-0 input projection hoisted out of the serial recurrence:
        # one big (S*B, IN_PAD) x (IN_PAD, 4H) MXU matmul, bias folded in.
        xproj_scr[...] = (
            jnp.dot(x_ref[...], wih_ref[0],
                    preferred_element_type=jnp.float32) + b_ref[0])

        # Per-layer weights, loaded once and held across all timesteps.
        whh = [whh_ref[l] for l in range(L)]
        wih = [None] + [wih_ref[l][:H, :] for l in range(1, L)]  # drop pad rows
        bias = [None] + [b_ref[l] for l in range(1, L)]

        h = [jnp.zeros((B, H), jnp.float32) for _ in range(L)]
        c = [jnp.zeros((B, H), jnp.float32) for _ in range(L)]
        out_prev = [None] * L  # most recent h output of each layer

        def cell(gates, c_prev):
            acts = a_vec * jax.nn.sigmoid(gates) + b_vec   # one EUP op + 1 FMA
            i_g = acts[:, 0 * H:1 * H]
            f_g = acts[:, 1 * H:2 * H]
            g_g = acts[:, 2 * H:3 * H]
            o_g = acts[:, 3 * H:4 * H]
            c_new = f_g * c_prev + i_g * g_g
            h_new = o_g * jnp.tanh(c_new)
            return h_new, c_new

        # Wavefront over (layer, time): diagonal d runs (l, t=d-l) for all
        # valid l.  Layer l's step-t input is layer l-1's step-t output from
        # diagonal d-1, so all work inside one diagonal is independent.
        for d in range(S + L - 1):
            snap = list(out_prev)            # prev-layer outputs from diag d-1
            for l in range(L):
                t = d - l
                if t < 0 or t >= S:
                    continue
                if l == 0:
                    gates = xproj_scr[pl.ds(t * B, B), :] + jnp.dot(
                        h[0], whh[0], preferred_element_type=jnp.float32)
                else:
                    gates = (jnp.dot(snap[l - 1], wih[l],
                                     preferred_element_type=jnp.float32)
                             + jnp.dot(h[l], whh[l],
                                       preferred_element_type=jnp.float32)
                             + bias[l])
                h_new, c_new = cell(gates, c[l])
                h[l], c[l] = h_new, c_new
                out_prev[l] = h_new
                if l == L - 1:
                    # t*B is a static multiple of 8 -> aligned row-block store.
                    y_ref[pl.ds(t * B, B), :] = h_new

    return kernel


def _encoder_pallas(wih, whh, bias, x):
    """wih: (L, IN_PAD, 4H); whh: (L, H, 4H); bias: (L, 1, 4H); x: (S, B, I)."""
    S, B, I = x.shape
    L, in_pad, G = wih.shape
    H = whh.shape[1]
    if I < in_pad:
        x = jnp.pad(x, ((0, 0), (0, 0), (0, in_pad - I)))
    x2d = x.reshape(S * B, in_pad)           # kernel sees pure 2-D layouts

    vmem_spec = pl.BlockSpec(memory_space=pltpu.MemorySpace.VMEM)
    out2d = pl.pallas_call(
        _make_encoder_kernel(S, B, L, H),
        out_shape=jax.ShapeDtypeStruct((S * B, H), jnp.float32),
        in_specs=[vmem_spec, vmem_spec, vmem_spec, vmem_spec],
        out_specs=vmem_spec,
        scratch_shapes=[pltpu.VMEM((S * B, G), jnp.float32)],
    )(x2d, wih, whh, bias)

    # direction_size == 1 (by_direction=False): the reshape / [:, :, -1, :]
    # slice in the PyTorch forward is an identity.
    return out2d.reshape(S, B, H)


encoder_forward = jax.jit(_encoder_pallas)


# --------------------------------------------------------------------------
# Parameter init (PyTorch-style) + one-time packing for the kernel.
# --------------------------------------------------------------------------
def _orthogonal(key, shape):
    """Deterministic orthogonal init (like torch.nn.init.orthogonal_)."""
    rows, cols = shape
    flat = jax.random.normal(key, (max(rows, cols), min(rows, cols)), jnp.float32)
    q, r = jnp.linalg.qr(flat)
    q = q * jnp.sign(jnp.diag(r))[None, :]
    if rows < cols:
        q = q.T
    return q[:rows, :cols]


def init_encoder_params(key, covariate_size, target_width, hidden_size, layer_size):
    input_size = covariate_size + target_width * (target_width - 1)
    params = []
    in_sz = input_size
    for _ in range(layer_size):
        key, k1, k2, k3, k4 = jax.random.split(key, 5)
        w_ih = _orthogonal(k1, (4 * hidden_size, in_sz))
        w_hh = _orthogonal(k2, (4 * hidden_size, hidden_size))
        b_ih = jax.random.normal(k3, (4 * hidden_size,), jnp.float32)
        b_hh = jax.random.normal(k4, (4 * hidden_size,), jnp.float32)
        params.append((w_ih, w_hh, b_ih, b_hh))
        in_sz = hidden_size
    return params, input_size


def pack_encoder_params(params, hidden_size):
    """Pre-transpose, stack, zero-pad and gate-scale weights once (not per call).

    The g-gate (tanh) columns of W_ih^T / W_hh^T / (b_ih+b_hh) are scaled by 2
    so the kernel can evaluate tanh via a single full-width sigmoid:
    tanh(x) = 2*sigmoid(2x) - 1.
    """
    H = hidden_size
    G = 4 * H
    assert H % 8 == 0, "hidden_size should be a multiple of 8 for sublane tiling"
    in0 = params[0][0].shape[1]
    in_pad = ((max(in0, H) + 7) // 8) * 8
    col = jnp.arange(G)
    gscale = jnp.where((col >= 2 * H) & (col < 3 * H), 2.0, 1.0).astype(jnp.float32)

    wih_l, whh_l, b_l = [], [], []
    for (w_ih, w_hh, b_ih, b_hh) in params:
        w = jnp.transpose(w_ih) * gscale            # (in, 4H)
        pad = in_pad - w.shape[0]
        if pad:
            w = jnp.pad(w, ((0, pad), (0, 0)))      # zero rows -> exact math
        wih_l.append(w)
        whh_l.append(jnp.transpose(w_hh) * gscale)  # (H, 4H)
        b_l.append(((b_ih + b_hh) * gscale).reshape(1, G))
    return jnp.stack(wih_l), jnp.stack(whh_l), jnp.stack(b_l)


# --------------------------------------------------------------------------
# Pure-JAX reference (for a correctness spot check)
# --------------------------------------------------------------------------
def _lstm_layer_ref(x, w_ih, w_hh, b_ih, b_hh):
    S, B, _ = x.shape
    H = w_hh.shape[1]

    def step(carry, x_t):
        h, c = carry
        gates = x_t @ w_ih.T + h @ w_hh.T + b_ih + b_hh
        i_g = jax.nn.sigmoid(gates[:, 0 * H:1 * H])
        f_g = jax.nn.sigmoid(gates[:, 1 * H:2 * H])
        g_g = jnp.tanh(gates[:, 2 * H:3 * H])
        o_g = jax.nn.sigmoid(gates[:, 3 * H:4 * H])
        c_new = f_g * c + i_g * g_g
        h_new = o_g * jnp.tanh(c_new)
        return (h_new, c_new), h_new

    init = (jnp.zeros((B, H), jnp.float32), jnp.zeros((B, H), jnp.float32))
    _, ys = jax.lax.scan(step, init, x)
    return ys


def encoder_forward_ref(params, x):
    out = x
    for (w_ih, w_hh, b_ih, b_hh) in params:
        out = _lstm_layer_ref(out, w_ih, w_hh, b_ih, b_hh)
    return out


# --------------------------------------------------------------------------
if __name__ == "__main__":
    # Module hyper-parameters (consistent with the PyTorch __init__):
    horizon_size = 4          # unused in forward
    covariate_size = 4
    target_width = 3          # input_size = 4 + 3*2 = 10
    hidden_size = 32
    dropout = 0.0             # TODO(synk): training-mode inter-layer dropout not implemented (eval semantics)
    layer_size = 2
    by_direction = False      # direction_size = 1

    seq_len = 8
    batch_size = 8

    key = jax.random.PRNGKey(0)
    pkey, xkey = jax.random.split(key)

    params, input_size = init_encoder_params(
        pkey, covariate_size, target_width, hidden_size, layer_size)
    wih_p, whh_p, bias_p = pack_encoder_params(params, hidden_size)

    x = jax.random.normal(xkey, (seq_len, batch_size, input_size), jnp.float32)

    out = encoder_forward(wih_p, whh_p, bias_p, x)
    out = jax.block_until_ready(out)

    # Spot-check against a pure-JAX reference LSTM stack (tolerance covers the
    # tanh(x) = 2*sigmoid(2x)-1 rewrite, which differs at the ULP level).
    ref = jax.block_until_ready(encoder_forward_ref(params, x))
    assert out.shape == (seq_len, batch_size, hidden_size)
    assert jnp.allclose(out, ref, atol=5e-4, rtol=5e-4)

    print("KERNEL_OK")
</pallas_src>

<mosaic_0001>
module attributes {stable_mosaic.version = 11 : i64} {
  func.func @kernel(%arg0: memref<64x32xf32, #tpu.memory_space<vmem>>, %arg1: memref<2x32x128xf32, #tpu.memory_space<vmem>>, %arg2: memref<2x32x128xf32, #tpu.memory_space<vmem>>, %arg3: memref<2x1x128xf32, #tpu.memory_space<vmem>>, %arg4: memref<64x32xf32, #tpu.memory_space<vmem>>, %arg5: memref<64x128xf32, #tpu.memory_space<vmem>>) attributes {dimension_semantics = [], scalar_prefetch = 0 : i64, scratch_operands = 1 : i64, tpu.core_type = #tpu.core_type<tc>} {
    %0 = tpu.iota {dimensions = array<i32: 1>} : vector<8x128xi32>
    %c64_i32 = arith.constant 64 : i32
    %1 = vector.broadcast %c64_i32 : i32 to vector<8x128xi32>
    %2 = arith.cmpi sge, %0, %1 : vector<8x128xi32>
    %c96_i32 = arith.constant 96 : i32
    %3 = vector.broadcast %c96_i32 : i32 to vector<8x128xi32>
    %4 = arith.cmpi slt, %0, %3 : vector<8x128xi32>
    %5 = arith.andi %2, %4 : vector<8x128xi1>
    %cst = arith.constant 2.000000e+00 : f32
    %cst_0 = arith.constant 1.000000e+00 : f32
    %6 = vector.broadcast %cst : f32 to vector<8x128xf32>
    %7 = vector.broadcast %cst_0 : f32 to vector<8x128xf32>
    %8 = arith.select %5, %6, %7 : vector<8x128xi1>, vector<8x128xf32>
    %cst_1 = arith.constant -1.000000e+00 : f32
    %cst_2 = arith.constant 0.000000e+00 : f32
    %9 = vector.broadcast %cst_1 : f32 to vector<8x128xf32>
    %10 = vector.broadcast %cst_2 : f32 to vector<8x128xf32>
    %11 = arith.select %5, %9, %10 : vector<8x128xi1>, vector<8x128xf32>
    %c0 = arith.constant 0 : index
    %c0_3 = arith.constant 0 : index
    %12 = vector.load %arg0[%c0, %c0_3] : memref<64x32xf32, #tpu.memory_space<vmem>>, vector<64x32xf32>
    %c0_4 = arith.constant 0 : index
    %c0_5 = arith.constant 0 : index
    %c0_6 = arith.constant 0 : index
    %13 = vector.load %arg1[%c0_4, %c0_5, %c0_6] : memref<2x32x128xf32, #tpu.memory_space<vmem>>, vector<1x32x128xf32>
    %14 = vector.shape_cast %13 : vector<1x32x128xf32> to vector<32x128xf32>
    %cst_7 = arith.constant dense<0.000000e+00> : vector<64x128xf32>
    %15 = tpu.matmul %12, %14, %cst_7 {dimension_numbers = #tpu.dot_dimension_numbers<[1], [0], [0], [1], [0, 0, 1, 1], [], []>} : vector<64x32xf32>, vector<32x128xf32>, vector<64x128xf32> -> vector<64x128xf32>
    %c0_8 = arith.constant 0 : index
    %c0_9 = arith.constant 0 : index
    %c0_10 = arith.constant 0 : index
    %16 = vector.load %arg3[%c0_8, %c0_9, %c0_10] : memref<2x1x128xf32, #tpu.memory_space<vmem>>, vector<1x1x128xf32>
    %17 = vector.shape_cast %16 : vector<1x1x128xf32> to vector<1x128xf32>
    %18 = vector.broadcast %17 : vector<1x128xf32> to vector<64x128xf32>
    %19 = arith.addf %15, %18 : vector<64x128xf32>
    %c0_11 = arith.constant 0 : index
    %c0_12 = arith.constant 0 : index
    %20 = vector.load %arg5[%c0_11, %c0_12] : memref<64x128xf32, #tpu.memory_space<vmem>>, vector<64x128xf32>
    tpu.vector_store %arg5[%c0_11, %c0_12], %19 {strides = array<i32>} : memref<64x128xf32, #tpu.memory_space<vmem>>, vector<64x128xf32>,
    %c0_13 = arith.constant 0 : index
    %c0_14 = arith.constant 0 : index
    %c0_15 = arith.constant 0 : index
    %21 = vector.load %arg2[%c0_13, %c0_14, %c0_15] : memref<2x32x128xf32, #tpu.memory_space<vmem>>, vector<1x32x128xf32>
    %22 = vector.shape_cast %21 : vector<1x32x128xf32> to vector<32x128xf32>
    %c1 = arith.constant 1 : index
    %c0_16 = arith.constant 0 : index
    %c0_17 = arith.constant 0 : index
    %23 = vector.load %arg2[%c1, %c0_16, %c0_17] : memref<2x32x128xf32, #tpu.memory_space<vmem>>, vector<1x32x128xf32>
    %24 = vector.shape_cast %23 : vector<1x32x128xf32> to vector<32x128xf32>
    %c1_18 = arith.constant 1 : index
    %c0_19 = arith.constant 0 : index
    %c0_20 = arith.constant 0 : index
    %25 = vector.load %arg1[%c1_18, %c0_19, %c0_20] : memref<2x32x128xf32, #tpu.memory_space<vmem>>, vector<1x32x128xf32>
    %26 = vector.shape_cast %25 : vector<1x32x128xf32> to vector<32x128xf32>
    %c1_21 = arith.constant 1 : index
    %c0_22 = arith.constant 0 : index
    %c0_23 = arith.constant 0 : index
    %27 = vector.load %arg3[%c1_21, %c0_22, %c0_23] : memref<2x1x128xf32, #tpu.memory_space<vmem>>, vector<1x1x128xf32>
    %28 = vector.shape_cast %27 : vector<1x1x128xf32> to vector<1x128xf32>
    %cst_24 = arith.constant 0.000000e+00 : f32
    %29 = vector.broadcast %cst_24 : f32 to vector<8x32xf32>
    %cst_25 = arith.constant 0.000000e+00 : f32
    %30 = vector.broadcast %cst_25 : f32 to vector<8x32xf32>
    %cst_26 = arith.constant 0.000000e+00 : f32
    %31 = vector.broadcast %cst_26 : f32 to vector<8x32xf32>
    %cst_27 = arith.constant 0.000000e+00 : f32
    %32 = vector.broadcast %cst_27 : f32 to vector<8x32xf32>
    %c0_28 = arith.constant 0 : index
    %c0_29 = arith.constant 0 : index
    %33 = vector.load %arg5[%c0_28, %c0_29] : memref<64x128xf32, #tpu.memory_space<vmem>>, vector<8x128xf32>
    %cst_30 = arith.constant dense<0.000000e+00> : vector<8x128xf32>
    %34 = tpu.matmul %29, %22, %cst_30 {dimension_numbers = #tpu.dot_dimension_numbers<[1], [0], [0], [1], [0, 0, 1, 1], [], []>} : vector<8x32xf32>, vector<32x128xf32>, vector<8x128xf32> -> vector<8x128xf32>
    %35 = arith.addf %33, %34 : vector<8x128xf32>
    %36 = arith.negf %35 : vector<8x128xf32>
    %37 = math.exp %36 : vector<8x128xf32>
    %cst_31 = arith.constant 1.000000e+00 : f32
    %38 = vector.broadcast %cst_31 : f32 to vector<8x128xf32>
    %39 = arith.addf %38, %37 : vector<8x128xf32>
    %40 = arith.divf %38, %39 : vector<8x128xf32>
    %41 = arith.mulf %8, %40 : vector<8x128xf32>
    %42 = arith.addf %41, %11 : vector<8x128xf32>
    %43 = vector.extract_strided_slice %42 {offsets = [0, 0], sizes = [8, 32], strides = [1, 1]} : vector<8x128xf32> to vector<8x32xf32>
    %44 = vector.extract_strided_slice %42 {offsets = [0, 32], sizes = [8, 32], strides = [1, 1]} : vector<8x128xf32> to vector<8x32xf32>
    %45 = vector.extract_strided_slice %42 {offsets = [0, 64], sizes = [8, 32], strides = [1, 1]} : vector<8x128xf32> to vector<8x32xf32>
    %46 = vector.extract_strided_slice %42 {offsets = [0, 96], sizes = [8, 32], strides = [1, 1]} : vector<8x128xf32> to vector<8x32xf32>
    %47 = arith.mulf %44, %31 : vector<8x32xf32>
    %48 = arith.mulf %43, %45 : vector<8x32xf32>
    %49 = arith.addf %47, %48 : vector<8x32xf32>
    %50 = math.tanh %49 : vector<8x32xf32>
    %51 = arith.mulf %46, %50 : vector<8x32xf32>
    %c8 = arith.constant 8 : index
    %c0_32 = arith.constant 0 : index
    %52 = vector.load %arg5[%c8, %c0_32] : memref<64x128xf32, #tpu.memory_space<vmem>>, vector<8x128xf32>
    %cst_33 = arith.constant dense<0.000000e+00> : vector<8x128xf32>
    %53 = tpu.matmul %51, %22, %cst_33 {dimension_numbers = #tpu.dot_dimension_numbers<[1], [0], [0], [1], [0, 0, 1, 1], [], []>} : vector<8x32xf32>, vector<32x128xf32>, vector<8x128xf32> -> vector<8x128xf32>
    %54 = arith.addf %52, %53 : vector<8x128xf32>
    %55 = arith.negf %54 : vector<8x128xf32>
    %56 = math.exp %55 : vector<8x128xf32>
    %cst_34 = arith.constant 1.000000e+00 : f32
    %57 = vector.broadcast %cst_34 : f32 to vector<8x128xf32>
    %58 = arith.addf %57, %56 : vector<8x128xf32>
    %59 = arith.divf %57, %58 : vector<8x128xf32>
    %60 = arith.mulf %8, %59 : vector<8x128xf32>
    %61 = arith.addf %60, %11 : vector<8x128xf32>
    %62 = vector.extract_strided_slice %61 {offsets = [0, 0], sizes = [8, 32], strides = [1, 1]} : vector<8x128xf32> to vector<8x32xf32>
    %63 = vector.extract_strided_slice %61 {offsets = [0, 32], sizes = [8, 32], strides = [1, 1]} : vector<8x128xf32> to vector<8x32xf32>
    %64 = vector.extract_strided_slice %61 {offsets = [0, 64], sizes = [8, 32], strides = [1, 1]} : vector<8x128xf32> to vector<8x32xf32>
    %65 = vector.extract_strided_slice %61 {offsets = [0, 96], sizes = [8, 32], strides = [1, 1]} : vector<8x128xf32> to vector<8x32xf32>
    %66 = arith.mulf %63, %49 : vector<8x32xf32>
    %67 = arith.mulf %62, %64 : vector<8x32xf32>
    %68 = arith.addf %66, %67 : vector<8x32xf32>
    %69 = math.tanh %68 : vector<8x32xf32>
    %70 = arith.mulf %65, %69 : vector<8x32xf32>
    %cst_35 = arith.constant dense<0.000000e+00> : vector<8x128xf32>
    %71 = tpu.matmul %51, %26, %cst_35 {dimension_numbers = #tpu.dot_dimension_numbers<[1], [0], [0], [1], [0, 0, 1, 1], [], []>} : vector<8x32xf32>, vector<32x128xf32>, vector<8x128xf32> -> vector<8x128xf32>
    %cst_36 = arith.constant dense<0.000000e+00> : vector<8x128xf32>
    %72 = tpu.matmul %30, %24, %cst_36 {dimension_numbers = #tpu.dot_dimension_numbers<[1], [0], [0], [1], [0, 0, 1, 1], [], []>} : vector<8x32xf32>, vector<32x128xf32>, vector<8x128xf32> -> vector<8x128xf32>
    %73 = arith.addf %71, %72 : vector<8x128xf32>
    %74 = vector.broadcast %28 : vector<1x128xf32> to vector<8x128xf32>
    %75 = arith.addf %73, %74 : vector<8x128xf32>
    %76 = arith.negf %75 : vector<8x128xf32>
    %77 = math.exp %76 : vector<8x128xf32>
    %cst_37 = arith.constant 1.000000e+00 : f32
    %78 = vector.broadcast %cst_37 : f32 to vector<8x128xf32>
    %79 = arith.addf %78, %77 : vector<8x128xf32>
    %80 = arith.divf %78, %79 : vector<8x128xf32>
    %81 = arith.mulf %8, %80 : vector<8x128xf32>
    %82 = arith.addf %81, %11 : vector<8x128xf32>
    %83 = vector.extract_strided_slice %82 {offsets = [0, 0], sizes = [8, 32], strides = [1, 1]} : vector<8x128xf32> to vector<8x32xf32>
    %84 = vector.extract_strided_slice %82 {offsets = [0, 32], sizes = [8, 32], strides = [1, 1]} : vector<8x128xf32> to vector<8x32xf32>
    %85 = vector.extract_strided_slice %82 {offsets = [0, 64], sizes = [8, 32], strides = [1, 1]} : vector<8x128xf32> to vector<8x32xf32>
    %86 = vector.extract_strided_slice %82 {offsets = [0, 96], sizes = [8, 32], strides = [1, 1]} : vector<8x128xf32> to vector<8x32xf32>
    %87 = arith.mulf %84, %32 : vector<8x32xf32>
    %88 = arith.mulf %83, %85 : vector<8x32xf32>
    %89 = arith.addf %87, %88 : vector<8x32xf32>
    %90 = math.tanh %89 : vector<8x32xf32>
    %91 = arith.mulf %86, %90 : vector<8x32xf32>
    %c0_38 = arith.constant 0 : index
    %c0_39 = arith.constant 0 : index
    %92 = vector.load %arg4[%c0_38, %c0_39] : memref<64x32xf32, #tpu.memory_space<vmem>>, vector<8x32xf32>
    tpu.vector_store %arg4[%c0_38, %c0_39], %91 {strides = array<i32>} : memref<64x32xf32, #tpu.memory_space<vmem>>, vector<8x32xf32>,
    %c16 = arith.constant 16 : index
    %c0_40 = arith.constant 0 : index
    %93 = vector.load %arg5[%c16, %c0_40] : memref<64x128xf32, #tpu.memory_space<vmem>>, vector<8x128xf32>
    %cst_41 = arith.constant dense<0.000000e+00> : vector<8x128xf32>
    %94 = tpu.matmul %70, %22, %cst_41 {dimension_numbers = #tpu.dot_dimension_numbers<[1], [0], [0], [1], [0, 0, 1, 1], [], []>} : vector<8x32xf32>, vector<32x128xf32>, vector<8x128xf32> -> vector<8x128xf32>
    %95 = arith.addf %93, %94 : vector<8x128xf32>
    %96 = arith.negf %95 : vector<8x128xf32>
    %97 = math.exp %96 : vector<8x128xf32>
    %cst_42 = arith.constant 1.000000e+00 : f32
    %98 = vector.broadcast %cst_42 : f32 to vector<8x128xf32>
    %99 = arith.addf %98, %97 : vector<8x128xf32>
    %100 = arith.divf %98, %99 : vector<8x128xf32>
    %101 = arith.mulf %8, %100 : vector<8x128xf32>
    %102 = arith.addf %101, %11 : vector<8x128xf32>
    %103 = vector.extract_strided_slice %102 {offsets = [0, 0], sizes = [8, 32], strides = [1, 1]} : vector<8x128xf32> to vector<8x32xf32>
    %104 = vector.extract_strided_slice %102 {offsets = [0, 32], sizes = [8, 32], strides = [1, 1]} : vector<8x128xf32> to vector<8x32xf32>
    %105 = vector.extract_strided_slice %102 {offsets = [0, 64], sizes = [8, 32], strides = [1, 1]} : vector<8x128xf32> to vector<8x32xf32>
    %106 = vector.extract_strided_slice %102 {offsets = [0, 96], sizes = [8, 32], strides = [1, 1]} : vector<8x128xf32> to vector<8x32xf32>
    %107 = arith.mulf %104, %68 : vector<8x32xf32>
    %108 = arith.mulf %103, %105 : vector<8x32xf32>
    %109 = arith.addf %107, %108 : vector<8x32xf32>
    %110 = math.tanh %109 : vector<8x32xf32>
    %111 = arith.mulf %106, %110 : vector<8x32xf32>
    %cst_43 = arith.constant dense<0.000000e+00> : vector<8x128xf32>
    %112 = tpu.matmul %70, %26, %cst_43 {dimension_numbers = #tpu.dot_dimension_numbers<[1], [0], [0], [1], [0, 0, 1, 1], [], []>} : vector<8x32xf32>, vector<32x128xf32>, vector<8x128xf32> -> vector<8x128xf32>
    %cst_44 = arith.constant dense<0.000000e+00> : vector<8x128xf32>
    %113 = tpu.matmul %91, %24, %cst_44 {dimension_numbers = #tpu.dot_dimension_numbers<[1], [0], [0], [1], [0, 0, 1, 1], [], []>} : vector<8x32xf32>, vector<32x128xf32>, vector<8x128xf32> -> vector<8x128xf32>
    %114 = arith.addf %112, %113 : vector<8x128xf32>
    %115 = vector.broadcast %28 : vector<1x128xf32> to vector<8x128xf32>
    %116 = arith.addf %114, %115 : vector<8x128xf32>
    %117 = arith.negf %116 : vector<8x128xf32>
    %118 = math.exp %117 : vector<8x128xf32>
    %cst_45 = arith.constant 1.000000e+00 : f32
    %119 = vector.broadcast %cst_45 : f32 to vector<8x128xf32>
    %120 = arith.addf %119, %118 : vector<8x128xf32>
    %121 = arith.divf %119, %120 : vector<8x128xf32>
    %122 = arith.mulf %8, %121 : vector<8x128xf32>
    %123 = arith.addf %122, %11 : vector<8x128xf32>
    %124 = vector.extract_strided_slice %123 {offsets = [0, 0], sizes = [8, 32], strides = [1, 1]} : vector<8x128xf32> to vector<8x32xf32>
    %125 = vector.extract_strided_slice %123 {offsets = [0, 32], sizes = [8, 32], strides = [1, 1]} : vector<8x128xf32> to vector<8x32xf32>
    %126 = vector.extract_strided_slice %123 {offsets = [0, 64], sizes = [8, 32], strides = [1, 1]} : vector<8x128xf32> to vector<8x32xf32>
    %127 = vector.extract_strided_slice %123 {offsets = [0, 96], sizes = [8, 32], strides = [1, 1]} : vector<8x128xf32> to vector<8x32xf32>
    %128 = arith.mulf %125, %89 : vector<8x32xf32>
    %129 = arith.mulf %124, %126 : vector<8x32xf32>
    %130 = arith.addf %128, %129 : vector<8x32xf32>
    %131 = math.tanh %130 : vector<8x32xf32>
    %132 = arith.mulf %127, %131 : vector<8x32xf32>
    %c8_46 = arith.constant 8 : index
    %c0_47 = arith.constant 0 : index
    %133 = vector.load %arg4[%c8_46, %c0_47] : memref<64x32xf32, #tpu.memory_space<vmem>>, vector<8x32xf32>
    tpu.vector_store %arg4[%c8_46, %c0_47], %132 {strides = array<i32>} : memref<64x32xf32, #tpu.memory_space<vmem>>, vector<8x32xf32>,
    %c24 = arith.constant 24 : index
    %c0_48 = arith.constant 0 : index
    %134 = vector.load %arg5[%c24, %c0_48] : memref<64x128xf32, #tpu.memory_space<vmem>>, vector<8x128xf32>
    %cst_49 = arith.constant dense<0.000000e+00> : vector<8x128xf32>
    %135 = tpu.matmul %111, %22, %cst_49 {dimension_numbers = #tpu.dot_dimension_numbers<[1], [0], [0], [1], [0, 0, 1, 1], [], []>} : vector<8x32xf32>, vector<32x128xf32>, vector<8x128xf32> -> vector<8x128xf32>
    %136 = arith.addf %134, %135 : vector<8x128xf32>
    %137 = arith.negf %136 : vector<8x128xf32>
    %138 = math.exp %137 : vector<8x128xf32>
    %cst_50 = arith.constant 1.000000e+00 : f32
    %139 = vector.broadcast %cst_50 : f32 to vector<8x128xf32>
    %140 = arith.addf %139, %138 : vector<8x128xf32>
    %141 = arith.divf %139, %140 : vector<8x128xf32>
    %142 = arith.mulf %8, %141 : vector<8x128xf32>
    %143 = arith.addf %142, %11 : vector<8x128xf32>
    %144 = vector.extract_strided_slice %143 {offsets = [0, 0], sizes = [8, 32], strides = [1, 1]} : vector<8x128xf32> to vector<8x32xf32>
    %145 = vector.extract_strided_slice %143 {offsets = [0, 32], sizes = [8, 32], strides = [1, 1]} : vector<8x128xf32> to vector<8x32xf32>
    %146 = vector.extract_strided_slice %143 {offsets = [0, 64], sizes = [8, 32], strides = [1, 1]} : vector<8x128xf32> to vector<8x32xf32>
    %147 = vector.extract_strided_slice %143 {offsets = [0, 96], sizes = [8, 32], strides = [1, 1]} : vector<8x128xf32> to vector<8x32xf32>
    %148 = arith.mulf %145, %109 : vector<8x32xf32>
    %149 = arith.mulf %144, %146 : vector<8x32xf32>
    %150 = arith.addf %148, %149 : vector<8x32xf32>
    %151 = math.tanh %150 : vector<8x32xf32>
    %152 = arith.mulf %147, %151 : vector<8x32xf32>
    %cst_51 = arith.constant dense<0.000000e+00> : vector<8x128xf32>
    %153 = tpu.matmul %111, %26, %cst_51 {dimension_numbers = #tpu.dot_dimension_numbers<[1], [0], [0], [1], [0, 0, 1, 1], [], []>} : vector<8x32xf32>, vector<32x128xf32>, vector<8x128xf32> -> vector<8x128xf32>
    %cst_52 = arith.constant dense<0.000000e+00> : vector<8x128xf32>
    %154 = tpu.matmul %132, %24, %cst_52 {dimension_numbers = #tpu.dot_dimension_numbers<[1], [0], [0], [1], [0, 0, 1, 1], [], []>} : vector<8x32xf32>, vector<32x128xf32>, vector<8x128xf32> -> vector<8x128xf32>
    %155 = arith.addf %153, %154 : vector<8x128xf32>
    %156 = vector.broadcast %28 : vector<1x128xf32> to vector<8x128xf32>
    %157 = arith.addf %155, %156 : vector<8x128xf32>
    %158 = arith.negf %157 : vector<8x128xf32>
    %159 = math.exp %158 : vector<8x128xf32>
    %cst_53 = arith.constant 1.000000e+00 : f32
    %160 = vector.broadcast %cst_53 : f32 to vector<8x128xf32>
    %161 = arith.addf %160, %159 : vector<8x128xf32>
    %162 = arith.divf %160, %161 : vector<8x128xf32>
    %163 = arith.mulf %8, %162 : vector<8x128xf32>
    %164 = arith.addf %163, %11 : vector<8x128xf32>
    %165 = vector.extract_strided_slice %164 {offsets = [0, 0], sizes = [8, 32], strides = [1, 1]} : vector<8x128xf32> to vector<8x32xf32>
    %166 = vector.extract_strided_slice %164 {offsets = [0, 32], sizes = [8, 32], strides = [1, 1]} : vector<8x128xf32> to vector<8x32xf32>
    %167 = vector.extract_strided_slice %164 {offsets = [0, 64], sizes = [8, 32], strides = [1, 1]} : vector<8x128xf32> to vector<8x32xf32>
    %168 = vector.extract_strided_slice %164 {offsets = [0, 96], sizes = [8, 32], strides = [1, 1]} : vector<8x128xf32> to vector<8x32xf32>
    %169 = arith.mulf %166, %130 : vector<8x32xf32>
    %170 = arith.mulf %165, %167 : vector<8x32xf32>
    %171 = arith.addf %169, %170 : vector<8x32xf32>
    %172 = math.tanh %171 : vector<8x32xf32>
    %173 = arith.mulf %168, %172 : vector<8x32xf32>
    %c16_54 = arith.constant 16 : index
    %c0_55 = arith.constant 0 : index
    %174 = vector.load %arg4[%c16_54, %c0_55] : memref<64x32xf32, #tpu.memory_space<vmem>>, vector<8x32xf32>
    tpu.vector_store %arg4[%c16_54, %c0_55], %173 {strides = array<i32>} : memref<64x32xf32, #tpu.memory_space<vmem>>, vector<8x32xf32>,
    %c32 = arith.constant 32 : index
    %c0_56 = arith.constant 0 : index
    %175 = vector.load %arg5[%c32, %c0_56] : memref<64x128xf32, #tpu.memory_space<vmem>>, vector<8x128xf32>
    %cst_57 = arith.constant dense<0.000000e+00> : vector<8x128xf32>
    %176 = tpu.matmul %152, %22, %cst_57 {dimension_numbers = #tpu.dot_dimension_numbers<[1], [0], [0], [1], [0, 0, 1, 1], [], []>} : vector<8x32xf32>, vector<32x128xf32>, vector<8x128xf32> -> vector<8x128xf32>
    %177 = arith.addf %175, %176 : vector<8x128xf32>
    %178 = arith.negf %177 : vector<8x128xf32>
    %179 = math.exp %178 : vector<8x128xf32>
    %cst_58 = arith.constant 1.000000e+00 : f32
    %180 = vector.broadcast %cst_58 : f32 to vector<8x128xf32>
    %181 = arith.addf %180, %179 : vector<8x128xf32>
    %182 = arith.divf %180, %181 : vector<8x128xf32>
    %183 = arith.mulf %8, %182 : vector<8x128xf32>
    %184 = arith.addf %183, %11 : vector<8x128xf32>
    %185 = vector.extract_strided_slice %184 {offsets = [0, 0], sizes = [8, 32], strides = [1, 1]} : vector<8x128xf32> to vector<8x32xf32>
    %186 = vector.extract_strided_slice %184 {offsets = [0, 32], sizes = [8, 32], strides = [1, 1]} : vector<8x128xf32> to vector<8x32xf32>
    %187 = vector.extract_strided_slice %184 {offsets = [0, 64], sizes = [8, 32], strides = [1, 1]} : vector<8x128xf32> to vector<8x32xf32>
    %188 = vector.extract_strided_slice %184 {offsets = [0, 96], sizes = [8, 32], strides = [1, 1]} : vector<8x128xf32> to vector<8x32xf32>
    %189 = arith.mulf %186, %150 : vector<8x32xf32>
    %190 = arith.mulf %185, %187 : vector<8x32xf32>
    %191 = arith.addf %189, %190 : vector<8x32xf32>
    %192 = math.tanh %191 : vector<8x32xf32>
    %193 = arith.mulf %188, %192 : vector<8x32xf32>
    %cst_59 = arith.constant dense<0.000000e+00> : vector<8x128xf32>
    %194 = tpu.matmul %152, %26, %cst_59 {dimension_numbers = #tpu.dot_dimension_numbers<[1], [0], [0], [1], [0, 0, 1, 1], [], []>} : vector<8x32xf32>, vector<32x128xf32>, vector<8x128xf32> -> vector<8x128xf32>
    %cst_60 = arith.constant dense<0.000000e+00> : vector<8x128xf32>
    %195 = tpu.matmul %173, %24, %cst_60 {dimension_numbers = #tpu.dot_dimension_numbers<[1], [0], [0], [1], [0, 0, 1, 1], [], []>} : vector<8x32xf32>, vector<32x128xf32>, vector<8x128xf32> -> vector<8x128xf32>
    %196 = arith.addf %194, %195 : vector<8x128xf32>
    %197 = vector.broadcast %28 : vector<1x128xf32> to vector<8x128xf32>
    %198 = arith.addf %196, %197 : vector<8x128xf32>
    %199 = arith.negf %198 : vector<8x128xf32>
    %200 = math.exp %199 : vector<8x128xf32>
    %cst_61 = arith.constant 1.000000e+00 : f32
    %201 = vector.broadcast %cst_61 : f32 to vector<8x128xf32>
    %202 = arith.addf %201, %200 : vector<8x128xf32>
    %203 = arith.divf %201, %202 : vector<8x128xf32>
    %204 = arith.mulf %8, %203 : vector<8x128xf32>
    %205 = arith.addf %204, %11 : vector<8x128xf32>
    %206 = vector.extract_strided_slice %205 {offsets = [0, 0], sizes = [8, 32], strides = [1, 1]} : vector<8x128xf32> to vector<8x32xf32>
    %207 = vector.extract_strided_slice %205 {offsets = [0, 32], sizes = [8, 32], strides = [1, 1]} : vector<8x128xf32> to vector<8x32xf32>
    %208 = vector.extract_strided_slice %205 {offsets = [0, 64], sizes = [8, 32], strides = [1, 1]} : vector<8x128xf32> to vector<8x32xf32>
    %209 = vector.extract_strided_slice %205 {offsets = [0, 96], sizes = [8, 32], strides = [1, 1]} : vector<8x128xf32> to vector<8x32xf32>
    %210 = arith.mulf %207, %171 : vector<8x32xf32>
    %211 = arith.mulf %206, %208 : vector<8x32xf32>
    %212 = arith.addf %210, %211 : vector<8x32xf32>
    %213 = math.tanh %212 : vector<8x32xf32>
    %214 = arith.mulf %209, %213 : vector<8x32xf32>
    %c24_62 = arith.constant 24 : index
    %c0_63 = arith.constant 0 : index
    %215 = vector.load %arg4[%c24_62, %c0_63] : memref<64x32xf32, #tpu.memory_space<vmem>>, vector<8x32xf32>
    tpu.vector_store %arg4[%c24_62, %c0_63], %214 {strides = array<i32>} : memref<64x32xf32, #tpu.memory_space<vmem>>, vector<8x32xf32>,
    %c40 = arith.constant 40 : index
    %c0_64 = arith.constant 0 : index
    %216 = vector.load %arg5[%c40, %c0_64] : memref<64x128xf32, #tpu.memory_space<vmem>>, vector<8x128xf32>
    %cst_65 = arith.constant dense<0.000000e+00> : vector<8x128xf32>
    %217 = tpu.matmul %193, %22, %cst_65 {dimension_numbers = #tpu.dot_dimension_numbers<[1], [0], [0], [1], [0, 0, 1, 1], [], []>} : vector<8x32xf32>, vector<32x128xf32>, vector<8x128xf32> -> vector<8x128xf32>
    %218 = arith.addf %216, %217 : vector<8x128xf32>
    %219 = arith.negf %218 : vector<8x128xf32>
    %220 = math.exp %219 : vector<8x128xf32>
    %cst_66 = arith.constant 1.000000e+00 : f32
    %221 = vector.broadcast %cst_66 : f32 to vector<8x128xf32>
    %222 = arith.addf %221, %220 : vector<8x128xf32>
    %223 = arith.divf %221, %222 : vector<8x128xf32>
    %224 = arith.mulf %8, %223 : vector<8x128xf32>
    %225 = arith.addf %224, %11 : vector<8x128xf32>
    %226 = vector.extract_strided_slice %225 {offsets = [0, 0], sizes = [8, 32], strides = [1, 1]} : vector<8x128xf32> to vector<8x32xf32>
    %227 = vector.extract_strided_slice %225 {offsets = [0, 32], sizes = [8, 32], strides = [1, 1]} : vector<8x128xf32> to vector<8x32xf32>
    %228 = vector.extract_strided_slice %225 {offsets = [0, 64], sizes = [8, 32], strides = [1, 1]} : vector<8x128xf32> to vector<8x32xf32>
    %229 = vector.extract_strided_slice %225 {offsets = [0, 96], sizes = [8, 32], strides = [1, 1]} : vector<8x128xf32> to vector<8x32xf32>
    %230 = arith.mulf %227, %191 : vector<8x32xf32>
    %231 = arith.mulf %226, %228 : vector<8x32xf32>
    %232 = arith.addf %230, %231 : vector<8x32xf32>
    %233 = math.tanh %232 : vector<8x32xf32>
    %234 = arith.mulf %229, %233 : vector<8x32xf32>
    %cst_67 = arith.constant dense<0.000000e+00> : vector<8x128xf32>
    %235 = tpu.matmul %193, %26, %cst_67 {dimension_numbers = #tpu.dot_dimension_numbers<[1], [0], [0], [1], [0, 0, 1, 1], [], []>} : vector<8x32xf32>, vector<32x128xf32>, vector<8x128xf32> -> vector<8x128xf32>
    %cst_68 = arith.constant dense<0.000000e+00> : vector<8x128xf32>
    %236 = tpu.matmul %214, %24, %cst_68 {dimension_numbers = #tpu.dot_dimension_numbers<[1], [0], [0], [1], [0, 0, 1, 1], [], []>} : vector<8x32xf32>, vector<32x128xf32>, vector<8x128xf32> -> vector<8x128xf32>
    %237 = arith.addf %235, %236 : vector<8x128xf32>
    %238 = vector.broadcast %28 : vector<1x128xf32> to vector<8x128xf32>
    %239 = arith.addf %237, %238 : vector<8x128xf32>
    %240 = arith.negf %239 : vector<8x128xf32>
    %241 = math.exp %240 : vector<8x128xf32>
    %cst_69 = arith.constant 1.000000e+00 : f32
    %242 = vector.broadcast %cst_69 : f32 to vector<8x128xf32>
    %243 = arith.addf %242, %241 : vector<8x128xf32>
    %244 = arith.divf %242, %243 : vector<8x128xf32>
    %245 = arith.mulf %8, %244 : vector<8x128xf32>
    %246 = arith.addf %245, %11 : vector<8x128xf32>
    %247 = vector.extract_strided_slice %246 {offsets = [0, 0], sizes = [8, 32], strides = [1, 1]} : vector<8x128xf32> to vector<8x32xf32>
    %248 = vector.extract_strided_slice %246 {offsets = [0, 32], sizes = [8, 32], strides = [1, 1]} : vector<8x128xf32> to vector<8x32xf32>
    %249 = vector.extract_strided_slice %246 {offsets = [0, 64], sizes = [8, 32], strides = [1, 1]} : vector<8x128xf32> to vector<8x32xf32>
    %250 = vector.extract_strided_slice %246 {offsets = [0, 96], sizes = [8, 32], strides = [1, 1]} : vector<8x128xf32> to vector<8x32xf32>
    %251 = arith.mulf %248, %212 : vector<8x32xf32>
    %252 = arith.mulf %247, %249 : vector<8x32xf32>
    %253 = arith.addf %251, %252 : vector<8x32xf32>
    %254 = math.tanh %253 : vector<8x32xf32>
    %255 = arith.mulf %250, %254 : vector<8x32xf32>
    %c32_70 = arith.constant 32 : index
    %c0_71 = arith.constant 0 : index
    %256 = vector.load %arg4[%c32_70, %c0_71] : memref<64x32xf32, #tpu.memory_space<vmem>>, vector<8x32xf32>
    tpu.vector_store %arg4[%c32_70, %c0_71], %255 {strides = array<i32>} : memref<64x32xf32, #tpu.memory_space<vmem>>, vector<8x32xf32>,
    %c48 = arith.constant 48 : index
    %c0_72 = arith.constant 0 : index
    %257 = vector.load %arg5[%c48, %c0_72] : memref<64x128xf32, #tpu.memory_space<vmem>>, vector<8x128xf32>
    %cst_73 = arith.constant dense<0.000000e+00> : vector<8x128xf32>
    %258 = tpu.matmul %234, %22, %cst_73 {dimension_numbers = #tpu.dot_dimension_numbers<[1], [0], [0], [1], [0, 0, 1, 1], [], []>} : vector<8x32xf32>, vector<32x128xf32>, vector<8x128xf32> -> vector<8x128xf32>
    %259 = arith.addf %257, %258 : vector<8x128xf32>
    %260 = arith.negf %259 : vector<8x128xf32>
    %261 = math.exp %260 : vector<8x128xf32>
    %cst_74 = arith.constant 1.000000e+00 : f32
    %262 = vector.broadcast %cst_74 : f32 to vector<8x128xf32>
    %263 = arith.addf %262, %261 : vector<8x128xf32>
    %264 = arith.divf %262, %263 : vector<8x128xf32>
    %265 = arith.mulf %8, %264 : vector<8x128xf32>
    %266 = arith.addf %265, %11 : vector<8x128xf32>
    %267 = vector.extract_strided_slice %266 {offsets = [0, 0], sizes = [8, 32], strides = [1, 1]} : vector<8x128xf32> to vector<8x32xf32>
    %268 = vector.extract_strided_slice %266 {offsets = [0, 32], sizes = [8, 32], strides = [1, 1]} : vector<8x128xf32> to vector<8x32xf32>
    %269 = vector.extract_strided_slice %266 {offsets = [0, 64], sizes = [8, 32], strides = [1, 1]} : vector<8x128xf32> to vector<8x32xf32>
    %270 = vector.extract_strided_slice %266 {offsets = [0, 96], sizes = [8, 32], strides = [1, 1]} : vector<8x128xf32> to vector<8x32xf32>
    %271 = arith.mulf %268, %232 : vector<8x32xf32>
    %272 = arith.mulf %267, %269 : vector<8x32xf32>
    %273 = arith.addf %271, %272 : vector<8x32xf32>
    %274 = math.tanh %273 : vector<8x32xf32>
    %275 = arith.mulf %270, %274 : vector<8x32xf32>
    %cst_75 = arith.constant dense<0.000000e+00> : vector<8x128xf32>
    %276 = tpu.matmul %234, %26, %cst_75 {dimension_numbers = #tpu.dot_dimension_numbers<[1], [0], [0], [1], [0, 0, 1, 1], [], []>} : vector<8x32xf32>, vector<32x128xf32>, vector<8x128xf32> -> vector<8x128xf32>
    %cst_76 = arith.constant dense<0.000000e+00> : vector<8x128xf32>
    %277 = tpu.matmul %255, %24, %cst_76 {dimension_numbers = #tpu.dot_dimension_numbers<[1], [0], [0], [1], [0, 0, 1, 1], [], []>} : vector<8x32xf32>, vector<32x128xf32>, vector<8x128xf32> -> vector<8x128xf32>
    %278 = arith.addf %276, %277 : vector<8x128xf32>
    %279 = vector.broadcast %28 : vector<1x128xf32> to vector<8x128xf32>
    %280 = arith.addf %278, %279 : vector<8x128xf32>
    %281 = arith.negf %280 : vector<8x128xf32>
    %282 = math.exp %281 : vector<8x128xf32>
    %cst_77 = arith.constant 1.000000e+00 : f32
    %283 = vector.broadcast %cst_77 : f32 to vector<8x128xf32>
    %284 = arith.addf %283, %282 : vector<8x128xf32>
    %285 = arith.divf %283, %284 : vector<8x128xf32>
    %286 = arith.mulf %8, %285 : vector<8x128xf32>
    %287 = arith.addf %286, %11 : vector<8x128xf32>
    %288 = vector.extract_strided_slice %287 {offsets = [0, 0], sizes = [8, 32], strides = [1, 1]} : vector<8x128xf32> to vector<8x32xf32>
    %289 = vector.extract_strided_slice %287 {offsets = [0, 32], sizes = [8, 32], strides = [1, 1]} : vector<8x128xf32> to vector<8x32xf32>
    %290 = vector.extract_strided_slice %287 {offsets = [0, 64], sizes = [8, 32], strides = [1, 1]} : vector<8x128xf32> to vector<8x32xf32>
    %291 = vector.extract_strided_slice %287 {offsets = [0, 96], sizes = [8, 32], strides = [1, 1]} : vector<8x128xf32> to vector<8x32xf32>
    %292 = arith.mulf %289, %253 : vector<8x32xf32>
    %293 = arith.mulf %288, %290 : vector<8x32xf32>
    %294 = arith.addf %292, %293 : vector<8x32xf32>
    %295 = math.tanh %294 : vector<8x32xf32>
    %296 = arith.mulf %291, %295 : vector<8x32xf32>
    %c40_78 = arith.constant 40 : index
    %c0_79 = arith.constant 0 : index
    %297 = vector.load %arg4[%c40_78, %c0_79] : memref<64x32xf32, #tpu.memory_space<vmem>>, vector<8x32xf32>
    tpu.vector_store %arg4[%c40_78, %c0_79], %296 {strides = array<i32>} : memref<64x32xf32, #tpu.memory_space<vmem>>, vector<8x32xf32>,
    %c56 = arith.constant 56 : index
    %c0_80 = arith.constant 0 : index
    %298 = vector.load %arg5[%c56, %c0_80] : memref<64x128xf32, #tpu.memory_space<vmem>>, vector<8x128xf32>
    %cst_81 = arith.constant dense<0.000000e+00> : vector<8x128xf32>
    %299 = tpu.matmul %275, %22, %cst_81 {dimension_numbers = #tpu.dot_dimension_numbers<[1], [0], [0], [1], [0, 0, 1, 1], [], []>} : vector<8x32xf32>, vector<32x128xf32>, vector<8x128xf32> -> vector<8x128xf32>
    %300 = arith.addf %298, %299 : vector<8x128xf32>
    %301 = arith.negf %300 : vector<8x128xf32>
    %302 = math.exp %301 : vector<8x128xf32>
    %cst_82 = arith.constant 1.000000e+00 : f32
    %303 = vector.broadcast %cst_82 : f32 to vector<8x128xf32>
    %304 = arith.addf %303, %302 : vector<8x128xf32>
    %305 = arith.divf %303, %304 : vector<8x128xf32>
    %306 = arith.mulf %8, %305 : vector<8x128xf32>
    %307 = arith.addf %306, %11 : vector<8x128xf32>
    %308 = vector.extract_strided_slice %307 {offsets = [0, 0], sizes = [8, 32], strides = [1, 1]} : vector<8x128xf32> to vector<8x32xf32>
    %309 = vector.extract_strided_slice %307 {offsets = [0, 32], sizes = [8, 32], strides = [1, 1]} : vector<8x128xf32> to vector<8x32xf32>
    %310 = vector.extract_strided_slice %307 {offsets = [0, 64], sizes = [8, 32], strides = [1, 1]} : vector<8x128xf32> to vector<8x32xf32>
    %311 = vector.extract_strided_slice %307 {offsets = [0, 96], sizes = [8, 32], strides = [1, 1]} : vector<8x128xf32> to vector<8x32xf32>
    %312 = arith.mulf %309, %273 : vector<8x32xf32>
    %313 = arith.mulf %308, %310 : vector<8x32xf32>
    %314 = arith.addf %312, %313 : vector<8x32xf32>
    %315 = math.tanh %314 : vector<8x32xf32>
    %316 = arith.mulf %311, %315 : vector<8x32xf32>
    %cst_83 = arith.constant dense<0.000000e+00> : vector<8x128xf32>
    %317 = tpu.matmul %275, %26, %cst_83 {dimension_numbers = #tpu.dot_dimension_numbers<[1], [0], [0], [1], [0, 0, 1, 1], [], []>} : vector<8x32xf32>, vector<32x128xf32>, vector<8x128xf32> -> vector<8x128xf32>
    %cst_84 = arith.constant dense<0.000000e+00> : vector<8x128xf32>
    %318 = tpu.matmul %296, %24, %cst_84 {dimension_numbers = #tpu.dot_dimension_numbers<[1], [0], [0], [1], [0, 0, 1, 1], [], []>} : vector<8x32xf32>, vector<32x128xf32>, vector<8x128xf32> -> vector<8x128xf32>
    %319 = arith.addf %317, %318 : vector<8x128xf32>
    %320 = vector.broadcast %28 : vector<1x128xf32> to vector<8x128xf32>
    %321 = arith.addf %319, %320 : vector<8x128xf32>
    %322 = arith.negf %321 : vector<8x128xf32>
    %323 = math.exp %322 : vector<8x128xf32>
    %cst_85 = arith.constant 1.000000e+00 : f32
    %324 = vector.broadcast %cst_85 : f32 to vector<8x128xf32>
    %325 = arith.addf %324, %323 : vector<8x128xf32>
    %326 = arith.divf %324, %325 : vector<8x128xf32>
    %327 = arith.mulf %8, %326 : vector<8x128xf32>
    %328 = arith.addf %327, %11 : vector<8x128xf32>
    %329 = vector.extract_strided_slice %328 {offsets = [0, 0], sizes = [8, 32], strides = [1, 1]} : vector<8x128xf32> to vector<8x32xf32>
    %330 = vector.extract_strided_slice %328 {offsets = [0, 32], sizes = [8, 32], strides = [1, 1]} : vector<8x128xf32> to vector<8x32xf32>
    %331 = vector.extract_strided_slice %328 {offsets = [0, 64], sizes = [8, 32], strides = [1, 1]} : vector<8x128xf32> to vector<8x32xf32>
    %332 = vector.extract_strided_slice %328 {offsets = [0, 96], sizes = [8, 32], strides = [1, 1]} : vector<8x128xf32> to vector<8x32xf32>
    %333 = arith.mulf %330, %294 : vector<8x32xf32>
    %334 = arith.mulf %329, %331 : vector<8x32xf32>
    %335 = arith.addf %333, %334 : vector<8x32xf32>
    %336 = math.tanh %335 : vector<8x32xf32>
    %337 = arith.mulf %332, %336 : vector<8x32xf32>
    %c48_86 = arith.constant 48 : index
    %c0_87 = arith.constant 0 : index
    %338 = vector.load %arg4[%c48_86, %c0_87] : memref<64x32xf32, #tpu.memory_space<vmem>>, vector<8x32xf32>
    tpu.vector_store %arg4[%c48_86, %c0_87], %337 {strides = array<i32>} : memref<64x32xf32, #tpu.memory_space<vmem>>, vector<8x32xf32>,
    %cst_88 = arith.constant dense<0.000000e+00> : vector<8x128xf32>
    %339 = tpu.matmul %316, %26, %cst_88 {dimension_numbers = #tpu.dot_dimension_numbers<[1], [0], [0], [1], [0, 0, 1, 1], [], []>} : vector<8x32xf32>, vector<32x128xf32>, vector<8x128xf32> -> vector<8x128xf32>
    %cst_89 = arith.constant dense<0.000000e+00> : vector<8x128xf32>
    %340 = tpu.matmul %337, %24, %cst_89 {dimension_numbers = #tpu.dot_dimension_numbers<[1], [0], [0], [1], [0, 0, 1, 1], [], []>} : vector<8x32xf32>, vector<32x128xf32>, vector<8x128xf32> -> vector<8x128xf32>
    %341 = arith.addf %339, %340 : vector<8x128xf32>
    %342 = vector.broadcast %28 : vector<1x128xf32> to vector<8x128xf32>
    %343 = arith.addf %341, %342 : vector<8x128xf32>
    %344 = arith.negf %343 : vector<8x128xf32>
    %345 = math.exp %344 : vector<8x128xf32>
    %cst_90 = arith.constant 1.000000e+00 : f32
    %346 = vector.broadcast %cst_90 : f32 to vector<8x128xf32>
    %347 = arith.addf %346, %345 : vector<8x128xf32>
    %348 = arith.divf %346, %347 : vector<8x128xf32>
    %349 = arith.mulf %8, %348 : vector<8x128xf32>
    %350 = arith.addf %349, %11 : vector<8x128xf32>
    %351 = vector.extract_strided_slice %350 {offsets = [0, 0], sizes = [8, 32], strides = [1, 1]} : vector<8x128xf32> to vector<8x32xf32>
    %352 = vector.extract_strided_slice %350 {offsets = [0, 32], sizes = [8, 32], strides = [1, 1]} : vector<8x128xf32> to vector<8x32xf32>
    %353 = vector.extract_strided_slice %350 {offsets = [0, 64], sizes = [8, 32], strides = [1, 1]} : vector<8x128xf32> to vector<8x32xf32>
    %354 = vector.extract_strided_slice %350 {offsets = [0, 96], sizes = [8, 32], strides = [1, 1]} : vector<8x128xf32> to vector<8x32xf32>
    %355 = arith.mulf %352, %335 : vector<8x32xf32>
    %356 = arith.mulf %351, %353 : vector<8x32xf32>
    %357 = arith.addf %355, %356 : vector<8x32xf32>
    %358 = math.tanh %357 : vector<8x32xf32>
    %359 = arith.mulf %354, %358 : vector<8x32xf32>
    %c56_91 = arith.constant 56 : index
    %c0_92 = arith.constant 0 : index
    %360 = vector.load %arg4[%c56_91, %c0_92] : memref<64x32xf32, #tpu.memory_space<vmem>>, vector<8x32xf32>
    tpu.vector_store %arg4[%c56_91, %c0_92], %359 {strides = array<i32>} : memref<64x32xf32, #tpu.memory_space<vmem>>, vector<8x32xf32>,
    return
  }
}

</mosaic_0001>

<llo_original>
// kernel: _encoder_pallas.1
$region0: #{_encoder_pallas.1}
  #allocation0 [shape = 'u32[]', space=smem, size = 0x4, offset = 0x4, fixed_abs, tag = 'smem constant byte address 0x4 - core index']
  #allocation1 [shape = 'u32[144,128]{1,0:T(1,128)}', space=vmem, size = 0x12000, scoped, tag = 'internal scratch']
  #allocation2 [shape = 'f32[64,128]{1,0:T(8,128)}', space=vmem, size = 0x8000, scoped, tag = 'scratch operand']
  %s0 = inlined_call_operand.vmem [shape: f32[64,32], index: 0, kind: input, shape index: {}]
  %s1 = inlined_call_operand.vmem [shape: f32[2,32,128], index: 1, kind: input, shape index: {}]
  %s2 = inlined_call_operand.vmem [shape: f32[2,32,128], index: 2, kind: input, shape index: {}]
  %s3 = inlined_call_operand.vmem [shape: f32[2,1,128], index: 3, kind: input, shape index: {}]
  %s4 = inlined_call_operand.hbm [shape: f32[64,32], index: 4, kind: output, shape index: {}]
  %s5 = sld [smem:[#allocation0]]
  $region26: #{_encoder_pallas.1} parent=0
    _
  %s7 = ssub.s32 1, %s5
  %s8 = scalar_select 0, %s7, %s5
  $region1: #{_encoder_pallas.1} parent=0
    #allocation3 [shape = 'u8[32768]{0}', space=vmem, size = 0x8000, scoped, tag = 'output window, operand 0, single buffered']
    #allocation4 [shape = 's32[1]{0}', space=sflag, size = 0x4, scoped, tag = 'scoped memory for _encoder_pallas.1']
    %9 = vsyncpa [#allocation4], 0
    // Predicated region
    $region2: #{_encoder_pallas.1} parent=1 // pred_check
      _
    $region3: #{_encoder_pallas.1} parent=1 // pred_check_branch
      %11 = sbr.rel (0) target = $region5
    $region4: #{_encoder_pallas.1} parent=1 // pred_region
      _
    $region5: #{_encoder_pallas.1} parent=1 // pred_fallthru
      _
    // Predicated region
    $region6: #{_encoder_pallas.1} parent=1 // pred_check
      _
    $region7: #{_encoder_pallas.1} parent=1 // pred_check_branch
      %13 = sbr.rel (0) target = $region9
    $region8: #{_encoder_pallas.1} parent=1 // pred_region
      _
    $region9: #{_encoder_pallas.1} parent=1 // pred_fallthru
      _
    // Predicated region
    $region10: #{_encoder_pallas.1} parent=1 // pred_check
      _
    $region11: #{_encoder_pallas.1} parent=1 // pred_check_branch
      %15 = sbr.rel (0) target = $region13
    $region12: #{_encoder_pallas.1} parent=1 // pred_region
      _
    $region13: #{_encoder_pallas.1} parent=1 // pred_fallthru
      _
    // Predicated region
    $region14: #{_encoder_pallas.1} parent=1 // pred_check
      _
    $region15: #{_encoder_pallas.1} parent=1 // pred_check_branch
      %17 = sbr.rel (0) target = $region17
    $region16: #{_encoder_pallas.1} parent=1 // pred_region
      _
    $region17: #{_encoder_pallas.1} parent=1 // pred_fallthru
      _
    %v18 = vlaneseq
    %v19 = vand.u32 %v18, 127
    %vm20 = vcmp.ge.s32.totalorder %v19, 64
    %vm21 = vcmp.lt.s32.totalorder %v19, 96
    %vm22 = vmand %vm20, %vm21
    %v23 = vsel %vm22, 2.0, 1.0
    %v24 = vsel %vm22, -1.0, 0.0
    %v25 = vld [vmem:[%s0] sm:$0xff]
    %v26 = vld [vmem:[%s0 + $0x8] sm:$0xff]
    %v27 = vld [vmem:[%s0 + $0x10] sm:$0xff]
    %v28 = vld [vmem:[%s0 + $0x18] sm:$0xff]
    %v29 = vld [vmem:[%s0 + $0x20] sm:$0xff]
    %v30 = vld [vmem:[%s0 + $0x28] sm:$0xff]
    %v31 = vld [vmem:[%s0 + $0x30] sm:$0xff]
    %v32 = vld [vmem:[%s0 + $0x38] sm:$0xff]
    %v33 = vld [vmem:[%s1] sm:$0xff]
    %v34 = vld [vmem:[%s1 + $0x8] sm:$0xff]
    %v35 = vld [vmem:[%s1 + $0x10] sm:$0xff]
    %v36 = vld [vmem:[%s1 + $0x18] sm:$0xff]
    %v37 = vld [vmem:[%s3] sm:$0x1]
    %v39 = vlaneseq
    %v40 = vshrl.u32 %v39, 7
    %v41 = vsub.s32 0, %v40
    %v42 = vrot.slane %v37, %v41
    %vm44 = vcmask 261120
    %v46 = vsel %vm44, %v25, 0
    %v49 = vsel %vm44, %v26, 0
    %v52 = vsel %vm44, %v27, 0
    %v55 = vsel %vm44, %v28, 0
    %v58 = vsel %vm44, %v29, 0
    %v61 = vsel %vm44, %v30, 0
    %v64 = vsel %vm44, %v31, 0
    %v67 = vsel %vm44, %v32, 0
    %69 = vmatprep.subr.mxu0 0.0
    %70 = vmatpush1.msra.mxu0 %v33
    %71 = vmatprep.subr.mxu0 0.0
    %72 = vmatpush1.msra.mxu0 %v34
    %73 = vmatprep.subr.mxu0 0.0
    %74 = vmatpush1.msra.mxu0 %v35
    %75 = vmatprep.subr.mxu0 0.0
    %76 = vmatpush1.msra.mxu0 %v36
    %77 = vmatprep.subr.mxu0 0.0
    %78 = vmatpush1.msra.mxu0 0.0
    %79 = vmatprep.subr.mxu0 0.0
    %80 = vmatpush1.msra.mxu0 0.0
    %81 = vmatprep.subr.mxu0 0.0
    %82 = vmatpush1.msra.mxu0 0.0
    %83 = vmatprep.subr.mxu0 0.0
    %84 = vmatpush1.msra.mxu0 0.0
    %85 = vmatprep.subr.mxu0 0.0
    %86 = vmatpush1.msra.mxu0 0.0
    %87 = vmatprep.subr.mxu0 0.0
    %88 = vmatpush1.msra.mxu0 0.0
    %89 = vmatprep.subr.mxu0 0.0
    %90 = vmatpush1.msra.mxu0 0.0
    %91 = vmatprep.subr.mxu0 0.0
    %92 = vmatpush1.msra.mxu0 0.0
    %93 = vmatprep.subr.mxu0 0.0
    %94 = vmatpush1.msra.mxu0 0.0
    %95 = vmatprep.subr.mxu0 0.0
    %96 = vmatpush1.msra.mxu0 0.0
    %97 = vmatprep.subr.mxu0 0.0
    %98 = vmatpush1.msra.mxu0 0.0
    %99 = vmatprep.subr.mxu0 0.0
    %100 = vmatpush1.msra.mxu0 0.0
    %101 = vmatprep.subr.mxu0 0.0
    %102 = vmatpush1.msra.mxu0 0.0
    %103 = vmatprep.subr.mxu0 0.0
    %104 = vmatpush1.msra.mxu0 0.0
    %105 = vmatprep.subr.mxu0 0.0
    %106 = vmatpush1.msra.mxu0 0.0
    %107 = vmatprep.subr.mxu0 0.0
    %108 = vmatpush1.msra.mxu0 0.0
    %109 = vmatprep.subr.mxu0 0.0
    %110 = vmatpush1.msra.mxu0 0.0
    %111 = vmatprep.subr.mxu0 0.0
    %112 = vmatpush1.msra.mxu0 0.0
    %113 = vmatprep.subr.mxu0 0.0
    %114 = vmatpush1.msra.mxu0 0.0
    %115 = vmatprep.subr.mxu0 0.0
    %116 = vmatpush1.msra.mxu0 0.0
    %117 = vmatprep.subr.mxu0 0.0
    %118 = vmatpush1.msra.mxu0 0.0
    %119 = vmatprep.subr.mxu0 0.0
    %120 = vmatpush1.msra.mxu0 0.0
    %121 = vmatprep.subr.mxu0 0.0
    %122 = vmatpush1.msra.mxu0 0.0
    %123 = vmatprep.subr.mxu0 0.0
    %124 = vmatpush1.msra.mxu0 0.0
    %125 = vmatprep.subr.mxu0 0.0
    %126 = vmatpush1.msra.mxu0 0.0
    %127 = vmatprep.subr.mxu0 0.0
    %128 = vmatpush1.msra.mxu0 0.0
    %129 = vmatprep.subr.mxu0 0.0
    %130 = vmatpush1.msra.mxu0 0.0
    %131 = vmatprep.subr.mxu0 0.0
    %132 = vmatpush1.msra.mxu0 0.0
    %133 = vmatprep.mubr.f32.mxu0 0.0
    %134 = vmatmul.mubr.f32.gmra.mrb[0].mxu0 %v46
    %v135 = vpop.f32.mrb[0].mxu0
    %v136 = vadd.f32 %v42, %v135
    %v137 = vpop.f32.mrb[0].mxu0
    %138 = vmatprep.mubr.f32.mxu0 0.0
    %139 = vmatmul.mubr.f32.gmra.mrb[0].mxu0 %v49
    %v140 = vpop.f32.mrb[0].mxu0
    %v141 = vadd.f32 %v42, %v140
    %v142 = vpop.f32.mrb[0].mxu0
    %143 = vmatprep.mubr.f32.mxu0 0.0
    %144 = vmatmul.mubr.f32.gmra.mrb[0].mxu0 %v52
    %v145 = vpop.f32.mrb[0].mxu0
    %v146 = vadd.f32 %v42, %v145
    %v147 = vpop.f32.mrb[0].mxu0
    %148 = vmatprep.mubr.f32.mxu0 0.0
    %149 = vmatmul.mubr.f32.gmra.mrb[0].mxu0 %v55
    %v150 = vpop.f32.mrb[0].mxu0
    %v151 = vadd.f32 %v42, %v150
    %v152 = vpop.f32.mrb[0].mxu0
    %153 = vmatprep.mubr.f32.mxu0 0.0
    %154 = vmatmul.mubr.f32.gmra.mrb[0].mxu0 %v58
    %v155 = vpop.f32.mrb[0].mxu0
    %v156 = vadd.f32 %v42, %v155
    %v157 = vpop.f32.mrb[0].mxu0
    %158 = vmatprep.mubr.f32.mxu0 0.0
    %159 = vmatmul.mubr.f32.gmra.mrb[0].mxu0 %v61
    %v160 = vpop.f32.mrb[0].mxu0
    %v161 = vadd.f32 %v42, %v160
    %v162 = vpop.f32.mrb[0].mxu0
    %163 = vmatprep.mubr.f32.mxu0 0.0
    %164 = vmatmul.mubr.f32.gmra.mrb[0].mxu0 %v64
    %v165 = vpop.f32.mrb[0].mxu0
    %v166 = vadd.f32 %v42, %v165
    %v167 = vpop.f32.mrb[0].mxu0
    %168 = vmatprep.mubr.f32.mxu0 0.0
    %169 = vmatmul.mubr.f32.gmra.mrb[0].mxu0 %v67
    %v170 = vpop.f32.mrb[0].mxu0
    %v171 = vadd.f32 %v42, %v170
    %v172 = vpop.f32.mrb[0].mxu0
    %173 = vdwg.mxu0
    %174 = vst [vmem:[#allocation2] sm:$0xff] %v136
    %175 = vst [vmem:[#allocation2 + $0x8] sm:$0xff] %v141
    %176 = vst [vmem:[#allocation2 + $0x10] sm:$0xff] %v146
    %177 = vst [vmem:[#allocation2 + $0x18] sm:$0xff] %v151
    %178 = vst [vmem:[#allocation2 + $0x20] sm:$0xff] %v156
    %179 = vst [vmem:[#allocation2 + $0x28] sm:$0xff] %v161
    %180 = vst [vmem:[#allocation2 + $0x30] sm:$0xff] %v166
    %181 = vst [vmem:[#allocation2 + $0x38] sm:$0xff] %v171
    %v182 = vld [vmem:[%s2] sm:$0xff]
    %v183 = vld [vmem:[%s2 + $0x8] sm:$0xff]
    %v184 = vld [vmem:[%s2 + $0x10] sm:$0xff]
    %v185 = vld [vmem:[%s2 + $0x18] sm:$0xff]
    %s186 = scalar_lea.vmem %s2, 32
    %v187 = vld [vmem:[%s186] sm:$0xff]
    %v188 = vld [vmem:[%s186 + $0x8] sm:$0xff]
    %v189 = vld [vmem:[%s186 + $0x10] sm:$0xff]
    %v190 = vld [vmem:[%s186 + $0x18] sm:$0xff]
    %s191 = scalar_lea.vmem %s1, 32
    %v192 = vld [vmem:[%s191] sm:$0xff]
    %v193 = vld [vmem:[%s191 + $0x8] sm:$0xff]
    %v194 = vld [vmem:[%s191 + $0x10] sm:$0xff]
    %v195 = vld [vmem:[%s191 + $0x18] sm:$0xff]
    %s196 = scalar_lea.vmem %s3, 1
    %v197 = vld [vmem:[%s196] sm:$0x1]
    %v198 = vld [vmem:[#allocation2] sm:$0xff]
    %v200 = vsel %vm44, 0.0, 0
    %202 = vmatprep.subr.mxu0 0.0
    %203 = vmatpush1.msra.mxu0 %v182
    %204 = vmatprep.subr.mxu0 0.0
    %205 = vmatpush1.msra.mxu0 %v183
    %206 = vmatprep.subr.mxu0 0.0
    %207 = vmatpush1.msra.mxu0 %v184
    %208 = vmatprep.subr.mxu0 0.0
    %209 = vmatpush1.msra.mxu0 %v185
    %210 = vmatprep.subr.mxu0 0.0
    %211 = vmatpush1.msra.mxu0 0.0
    %212 = vmatprep.subr.mxu0 0.0
    %213 = vmatpush1.msra.mxu0 0.0
    %214 = vmatprep.subr.mxu0 0.0
    %215 = vmatpush1.msra.mxu0 0.0
    %216 = vmatprep.subr.mxu0 0.0
    %217 = vmatpush1.msra.mxu0 0.0
    %218 = vmatprep.subr.mxu0 0.0
    %219 = vmatpush1.msra.mxu0 0.0
    %220 = vmatprep.subr.mxu0 0.0
    %221 = vmatpush1.msra.mxu0 0.0
    %222 = vmatprep.subr.mxu0 0.0
    %223 = vmatpush1.msra.mxu0 0.0
    %224 = vmatprep.subr.mxu0 0.0
    %225 = vmatpush1.msra.mxu0 0.0
    %226 = vmatprep.subr.mxu0 0.0
    %227 = vmatpush1.msra.mxu0 0.0
    %228 = vmatprep.subr.mxu0 0.0
    %229 = vmatpush1.msra.mxu0 0.0
    %230 = vmatprep.subr.mxu0 0.0
    %231 = vmatpush1.msra.mxu0 0.0
    %232 = vmatprep.subr.mxu0 0.0
    %233 = vmatpush1.msra.mxu0 0.0
    %234 = vmatprep.subr.mxu0 0.0
    %235 = vmatpush1.msra.mxu0 0.0
    %236 = vmatprep.subr.mxu0 0.0
    %237 = vmatpush1.msra.mxu0 0.0
    %238 = vmatprep.subr.mxu0 0.0
    %239 = vmatpush1.msra.mxu0 0.0
    %240 = vmatprep.subr.mxu0 0.0
    %241 = vmatpush1.msra.mxu0 0.0
    %242 = vmatprep.subr.mxu0 0.0
    %243 = vmatpush1.msra.mxu0 0.0
    %244 = vmatprep.subr.mxu0 0.0
    %245 = vmatpush1.msra.mxu0 0.0
    %246 = vmatprep.subr.mxu0 0.0
    %247 = vmatpush1.msra.mxu0 0.0
    %248 = vmatprep.subr.mxu0 0.0
    %249 = vmatpush1.msra.mxu0 0.0
    %250 = vmatprep.subr.mxu0 0.0
    %251 = vmatpush1.msra.mxu0 0.0
    %252 = vmatprep.subr.mxu0 0.0
    %253 = vmatpush1.msra.mxu0 0.0
    %254 = vmatprep.subr.mxu0 0.0
    %255 = vmatpush1.msra.mxu0 0.0
    %256 = vmatprep.subr.mxu0 0.0
    %257 = vmatpush1.msra.mxu0 0.0
    %258 = vmatprep.subr.mxu0 0.0
    %259 = vmatpush1.msra.mxu0 0.0
    %260 = vmatprep.subr.mxu0 0.0
    %261 = vmatpush1.msra.mxu0 0.0
    %262 = vmatprep.subr.mxu0 0.0
    %263 = vmatpush1.msra.mxu0 0.0
    %264 = vmatprep.subr.mxu0 0.0
    %265 = vmatpush1.msra.mxu0 0.0
    %266 = vmatprep.mubr.f32.mxu0 0.0
    %267 = vmatmul.mubr.f32.gmra.mrb[0].mxu0 %v200
    %v268 = vpop.f32.mrb[0].mxu0
    %v269 = vadd.f32 0.0, %v268
    %v270 = vpop.f32.mrb[0].mxu0
    %271 = vdwg.mxu0
    %v272 = vadd.f32 %v198, %v269
    %v273 = vxor.u32 %v272, 2147483648
    %v274 = vmul.f32 %v273, 1.442695
    %v275 = vpow.pop %v274
    %v276 = vadd.f32 %v275, 1.0
    %v277 = vrcp.pop %v276
    %v278 = vmul.f32 1.0, %v277
    %v279 = vmul.f32 %v23, %v278
    %v280 = vadd.f32 %v279, %v24
    %v281 = vmul.f32 %v280, 0.0
    %283 = vrot.lane.b32.xlu0 %v280, 64
    %v284 = vpop.permute.xlu0 %283
    %v286 = vmul.f32 %v280, %v284
    %288 = vrot.lane.b32.xlu0 %v286, 32
    %v289 = vpop.permute.xlu0 %288
    %v291 = vadd.f32 %v281, %v289
    %v292 = vtanh.pop %v291
    %294 = vrot.lane.b32.xlu0 %v292, 64
    %v295 = vpop.permute.xlu0 %294
    %v297 = vmul.f32 %v280, %v295
    %v298 = vld [vmem:[#allocation2 + $0x8] sm:$0xff]
    %300 = vrot.lane.b32.xlu0 %v297, 32
    %v301 = vpop.permute.xlu0 %300
    %v302 = vsel %vm44, %v301, 0
    %304 = vmatprep.subr.mxu0 0.0
    %305 = vmatpush1.msra.mxu0 %v182
    %306 = vmatprep.subr.mxu0 0.0
    %307 = vmatpush1.msra.mxu0 %v183
    %308 = vmatprep.subr.mxu0 0.0
    %309 = vmatpush1.msra.mxu0 %v184
    %310 = vmatprep.subr.mxu0 0.0
    %311 = vmatpush1.msra.mxu0 %v185
    %312 = vmatprep.subr.mxu0 0.0
    %313 = vmatpush1.msra.mxu0 0.0
    %314 = vmatprep.subr.mxu0 0.0
    %315 = vmatpush1.msra.mxu0 0.0
    %316 = vmatprep.subr.mxu0 0.0
    %317 = vmatpush1.msra.mxu0 0.0
    %318 = vmatprep.subr.mxu0 0.0
    %319 = vmatpush1.msra.mxu0 0.0
    %320 = vmatprep.subr.mxu0 0.0
    %321 = vmatpush1.msra.mxu0 0.0
    %322 = vmatprep.subr.mxu0 0.0
    %323 = vmatpush1.msra.mxu0 0.0
    %324 = vmatprep.subr.mxu0 0.0
    %325 = vmatpush1.msra.mxu0 0.0
    %326 = vmatprep.subr.mxu0 0.0
    %327 = vmatpush1.msra.mxu0 0.0
    %328 = vmatprep.subr.mxu0 0.0
    %329 = vmatpush1.msra.mxu0 0.0
    %330 = vmatprep.subr.mxu0 0.0
    %331 = vmatpush1.msra.mxu0 0.0
    %332 = vmatprep.subr.mxu0 0.0
    %333 = vmatpush1.msra.mxu0 0.0
    %334 = vmatprep.subr.mxu0 0.0
    %335 = vmatpush1.msra.mxu0 0.0
    %336 = vmatprep.subr.mxu0 0.0
    %337 = vmatpush1.msra.mxu0 0.0
    %338 = vmatprep.subr.mxu0 0.0
    %339 = vmatpush1.msra.mxu0 0.0
    %340 = vmatprep.subr.mxu0 0.0
    %341 = vmatpush1.msra.mxu0 0.0
    %342 = vmatprep.subr.mxu0 0.0
    %343 = vmatpush1.msra.mxu0 0.0
    %344 = vmatprep.subr.mxu0 0.0
    %345 = vmatpush1.msra.mxu0 0.0
    %346 = vmatprep.subr.mxu0 0.0
    %347 = vmatpush1.msra.mxu0 0.0
    %348 = vmatprep.subr.mxu0 0.0
    %349 = vmatpush1.msra.mxu0 0.0
    %350 = vmatprep.subr.mxu0 0.0
    %351 = vmatpush1.msra.mxu0 0.0
    %352 = vmatprep.subr.mxu0 0.0
    %353 = vmatpush1.msra.mxu0 0.0
    %354 = vmatprep.subr.mxu0 0.0
    %355 = vmatpush1.msra.mxu0 0.0
    %356 = vmatprep.subr.mxu0 0.0
    %357 = vmatpush1.msra.mxu0 0.0
    %358 = vmatprep.subr.mxu0 0.0
    %359 = vmatpush1.msra.mxu0 0.0
    %360 = vmatprep.subr.mxu0 0.0
    %361 = vmatpush1.msra.mxu0 0.0
    %362 = vmatprep.subr.mxu0 0.0
    %363 = vmatpush1.msra.mxu0 0.0
    %364 = vmatprep.subr.mxu0 0.0
    %365 = vmatpush1.msra.mxu0 0.0
    %366 = vmatprep.subr.mxu0 0.0
    %367 = vmatpush1.msra.mxu0 0.0
    %368 = vmatprep.mubr.f32.mxu0 0.0
    %369 = vmatmul.mubr.f32.gmra.mrb[0].mxu0 %v302
    %v370 = vpop.f32.mrb[0].mxu0
    %v371 = vadd.f32 0.0, %v370
    %v372 = vpop.f32.mrb[0].mxu0
    %373 = vdwg.mxu0
    %v374 = vadd.f32 %v298, %v371
    %v375 = vxor.u32 %v374, 2147483648
    %v376 = vmul.f32 %v375, 1.442695
    %v377 = vpow.pop %v376
    %v378 = vadd.f32 %v377, 1.0
    %v379 = vrcp.pop %v378
    %v380 = vmul.f32 1.0, %v379
    %v381 = vmul.f32 %v23, %v380
    %v382 = vadd.f32 %v381, %v24
    %v383 = vmul.f32 %v382, %v291
    %385 = vrot.lane.b32.xlu0 %v382, 64
    %v386 = vpop.permute.xlu0 %385
    %v388 = vmul.f32 %v382, %v386
    %390 = vrot.lane.b32.xlu0 %v388, 32
    %v391 = vpop.permute.xlu0 %390
    %v393 = vadd.f32 %v383, %v391
    %v394 = vtanh.pop %v393
    %396 = vrot.lane.b32.xlu0 %v394, 64
    %v397 = vpop.permute.xlu0 %396
    %v399 = vmul.f32 %v382, %v397
    %400 = vmatprep.subr.mxu0 0.0
    %401 = vmatpush1.msra.mxu0 %v187
    %402 = vmatprep.subr.mxu0 0.0
    %403 = vmatpush1.msra.mxu0 %v188
    %404 = vmatprep.subr.mxu0 0.0
    %405 = vmatpush1.msra.mxu0 %v189
    %406 = vmatprep.subr.mxu0 0.0
    %407 = vmatpush1.msra.mxu0 %v190
    %408 = vmatprep.subr.mxu0 0.0
    %409 = vmatpush1.msra.mxu0 0.0
    %410 = vmatprep.subr.mxu0 0.0
    %411 = vmatpush1.msra.mxu0 0.0
    %412 = vmatprep.subr.mxu0 0.0
    %413 = vmatpush1.msra.mxu0 0.0
    %414 = vmatprep.subr.mxu0 0.0
    %415 = vmatpush1.msra.mxu0 0.0
    %416 = vmatprep.subr.mxu0 0.0
    %417 = vmatpush1.msra.mxu0 0.0
    %418 = vmatprep.subr.mxu0 0.0
    %419 = vmatpush1.msra.mxu0 0.0
    %420 = vmatprep.subr.mxu0 0.0
    %421 = vmatpush1.msra.mxu0 0.0
    %422 = vmatprep.subr.mxu0 0.0
    %423 = vmatpush1.msra.mxu0 0.0
    %424 = vmatprep.subr.mxu0 0.0
    %425 = vmatpush1.msra.mxu0 0.0
    %426 = vmatprep.subr.mxu0 0.0
    %427 = vmatpush1.msra.mxu0 0.0
    %428 = vmatprep.subr.mxu0 0.0
    %429 = vmatpush1.msra.mxu0 0.0
    %430 = vmatprep.subr.mxu0 0.0
    %431 = vmatpush1.msra.mxu0 0.0
    %432 = vmatprep.subr.mxu0 0.0
    %433 = vmatpush1.msra.mxu0 0.0
    %434 = vmatprep.subr.mxu0 0.0
    %435 = vmatpush1.msra.mxu0 0.0
    %436 = vmatprep.subr.mxu0 0.0
    %437 = vmatpush1.msra.mxu0 0.0
    %438 = vmatprep.subr.mxu0 0.0
    %439 = vmatpush1.msra.mxu0 0.0
    %440 = vmatprep.subr.mxu0 0.0
    %441 = vmatpush1.msra.mxu0 0.0
    %442 = vmatprep.subr.mxu0 0.0
    %443 = vmatpush1.msra.mxu0 0.0
    %444 = vmatprep.subr.mxu0 0.0
    %445 = vmatpush1.msra.mxu0 0.0
    %446 = vmatprep.subr.mxu0 0.0
    %447 = vmatpush1.msra.mxu0 0.0
    %448 = vmatprep.subr.mxu0 0.0
    %449 = vmatpush1.msra.mxu0 0.0
    %450 = vmatprep.subr.mxu0 0.0
    %451 = vmatpush1.msra.mxu0 0.0
    %452 = vmatprep.subr.mxu0 0.0
    %453 = vmatpush1.msra.mxu0 0.0
    %454 = vmatprep.subr.mxu0 0.0
    %455 = vmatpush1.msra.mxu0 0.0
    %456 = vmatprep.subr.mxu0 0.0
    %457 = vmatpush1.msra.mxu0 0.0
    %458 = vmatprep.subr.mxu0 0.0
    %459 = vmatpush1.msra.mxu0 0.0
    %460 = vmatprep.subr.mxu0 0.0
    %461 = vmatpush1.msra.mxu0 0.0
    %462 = vmatprep.subr.mxu0 0.0
    %463 = vmatpush1.msra.mxu0 0.0
    %464 = vmatprep.mubr.f32.mxu0 0.0
    %465 = vmatmul.mubr.f32.gmra.mrb[0].mxu0 %v200
    %v466 = vpop.f32.mrb[0].mxu0
    %v467 = vadd.f32 0.0, %v466
    %v468 = vpop.f32.mrb[0].mxu0
    %469 = vdwg.mxu0
    %470 = vmatprep.subr.mxu0 0.0
    %471 = vmatpush1.msra.mxu0 %v192
    %472 = vmatprep.subr.mxu0 0.0
    %473 = vmatpush1.msra.mxu0 %v193
    %474 = vmatprep.subr.mxu0 0.0
    %475 = vmatpush1.msra.mxu0 %v194
    %476 = vmatprep.subr.mxu0 0.0
    %477 = vmatpush1.msra.mxu0 %v195
    %478 = vmatprep.subr.mxu0 0.0
    %479 = vmatpush1.msra.mxu0 0.0
    %480 = vmatprep.subr.mxu0 0.0
    %481 = vmatpush1.msra.mxu0 0.0
    %482 = vmatprep.subr.mxu0 0.0
    %483 = vmatpush1.msra.mxu0 0.0
    %484 = vmatprep.subr.mxu0 0.0
    %485 = vmatpush1.msra.mxu0 0.0
    %486 = vmatprep.subr.mxu0 0.0
    %487 = vmatpush1.msra.mxu0 0.0
    %488 = vmatprep.subr.mxu0 0.0
    %489 = vmatpush1.msra.mxu0 0.0
    %490 = vmatprep.subr.mxu0 0.0
    %491 = vmatpush1.msra.mxu0 0.0
    %492 = vmatprep.subr.mxu0 0.0
    %493 = vmatpush1.msra.mxu0 0.0
    %494 = vmatprep.subr.mxu0 0.0
    %495 = vmatpush1.msra.mxu0 0.0
    %496 = vmatprep.subr.mxu0 0.0
    %497 = vmatpush1.msra.mxu0 0.0
    %498 = vmatprep.subr.mxu0 0.0
    %499 = vmatpush1.msra.mxu0 0.0
    %500 = vmatprep.subr.mxu0 0.0
    %501 = vmatpush1.msra.mxu0 0.0
    %502 = vmatprep.subr.mxu0 0.0
    %503 = vmatpush1.msra.mxu0 0.0
    %504 = vmatprep.subr.mxu0 0.0
    %505 = vmatpush1.msra.mxu0 0.0
    %506 = vmatprep.subr.mxu0 0.0
    %507 = vmatpush1.msra.mxu0 0.0
    %508 = vmatprep.subr.mxu0 0.0
    %509 = vmatpush1.msra.mxu0 0.0
    %510 = vmatprep.subr.mxu0 0.0
    %511 = vmatpush1.msra.mxu0 0.0
    %512 = vmatprep.subr.mxu0 0.0
    %513 = vmatpush1.msra.mxu0 0.0
    %514 = vmatprep.subr.mxu0 0.0
    %515 = vmatpush1.msra.mxu0 0.0
    %516 = vmatprep.subr.mxu0 0.0
    %517 = vmatpush1.msra.mxu0 0.0
    %518 = vmatprep.subr.mxu0 0.0
    %519 = vmatpush1.msra.mxu0 0.0
    %520 = vmatprep.subr.mxu0 0.0
    %521 = vmatpush1.msra.mxu0 0.0
    %522 = vmatprep.subr.mxu0 0.0
    %523 = vmatpush1.msra.mxu0 0.0
    %524 = vmatprep.subr.mxu0 0.0
    %525 = vmatpush1.msra.mxu0 0.0
    %526 = vmatprep.subr.mxu0 0.0
    %527 = vmatpush1.msra.mxu0 0.0
    %528 = vmatprep.subr.mxu0 0.0
    %529 = vmatpush1.msra.mxu0 0.0
    %530 = vmatprep.subr.mxu0 0.0
    %531 = vmatpush1.msra.mxu0 0.0
    %532 = vmatprep.subr.mxu0 0.0
    %533 = vmatpush1.msra.mxu0 0.0
    %534 = vmatprep.mubr.f32.mxu0 0.0
    %535 = vmatmul.mubr.f32.gmra.mrb[0].mxu0 %v302
    %v536 = vpop.f32.mrb[0].mxu0
    %v537 = vadd.f32 %v467, %v536
    %v538 = vpop.f32.mrb[0].mxu0
    %539 = vdwg.mxu0
    %v541 = vlaneseq
    %v542 = vshrl.u32 %v541, 7
    %v543 = vsub.s32 0, %v542
    %v544 = vrot.slane %v197, %v543
    %v546 = vadd.f32 %v537, %v544
    %v547 = vxor.u32 %v546, 2147483648
    %v548 = vmul.f32 %v547, 1.442695
    %v549 = vpow.pop %v548
    %v550 = vadd.f32 %v549, 1.0
    %v551 = vrcp.pop %v550
    %v552 = vmul.f32 1.0, %v551
    %v553 = vmul.f32 %v23, %v552
    %v554 = vadd.f32 %v553, %v24
    %v555 = vmul.f32 %v554, 0.0
    %557 = vrot.lane.b32.xlu0 %v554, 64
    %v558 = vpop.permute.xlu0 %557
    %v560 = vmul.f32 %v554, %v558
    %562 = vrot.lane.b32.xlu0 %v560, 32
    %v563 = vpop.permute.xlu0 %562
    %v565 = vadd.f32 %v555, %v563
    %v566 = vtanh.pop %v565
    %568 = vrot.lane.b32.xlu0 %v566, 64
    %v569 = vpop.permute.xlu0 %568
    %v571 = vmul.f32 %v554, %v569
    %573 = vrot.lane.b32.xlu0 %v571, 32
    %v574 = vpop.permute.xlu0 %573
    %576 = vst.msk [vmem:[#allocation3] sm:$0xff] %vm44, %v574
    %v577 = vld [vmem:[#allocation2 + $0x10] sm:$0xff]
    %579 = vrot.lane.b32.xlu0 %v399, 32
    %v580 = vpop.permute.xlu0 %579
    %v581 = vsel %vm44, %v580, 0
    %583 = vmatprep.subr.mxu0 0.0
    %584 = vmatpush1.msra.mxu0 %v182
    %585 = vmatprep.subr.mxu0 0.0
    %586 = vmatpush1.msra.mxu0 %v183
    %587 = vmatprep.subr.mxu0 0.0
    %588 = vmatpush1.msra.mxu0 %v184
    %589 = vmatprep.subr.mxu0 0.0
    %590 = vmatpush1.msra.mxu0 %v185
    %591 = vmatprep.subr.mxu0 0.0
    %592 = vmatpush1.msra.mxu0 0.0
    %593 = vmatprep.subr.mxu0 0.0
    %594 = vmatpush1.msra.mxu0 0.0
    %595 = vmatprep.subr.mxu0 0.0
    %596 = vmatpush1.msra.mxu0 0.0
    %597 = vmatprep.subr.mxu0 0.0
    %598 = vmatpush1.msra.mxu0 0.0
    %599 = vmatprep.subr.mxu0 0.0
    %600 = vmatpush1.msra.mxu0 0.0
    %601 = vmatprep.subr.mxu0 0.0
    %602 = vmatpush1.msra.mxu0 0.0
    %603 = vmatprep.subr.mxu0 0.0
    %604 = vmatpush1.msra.mxu0 0.0
    %605 = vmatprep.subr.mxu0 0.0
    %606 = vmatpush1.msra.mxu0 0.0
    %607 = vmatprep.subr.mxu0 0.0
    %608 = vmatpush1.msra.mxu0 0.0
    %609 = vmatprep.subr.mxu0 0.0
    %610 = vmatpush1.msra.mxu0 0.0
    %611 = vmatprep.subr.mxu0 0.0
    %612 = vmatpush1.msra.mxu0 0.0
    %613 = vmatprep.subr.mxu0 0.0
    %614 = vmatpush1.msra.mxu0 0.0
    %615 = vmatprep.subr.mxu0 0.0
    %616 = vmatpush1.msra.mxu0 0.0
    %617 = vmatprep.subr.mxu0 0.0
    %618 = vmatpush1.msra.mxu0 0.0
    %619 = vmatprep.subr.mxu0 0.0
    %620 = vmatpush1.msra.mxu0 0.0
    %621 = vmatprep.subr.mxu0 0.0
    %622 = vmatpush1.msra.mxu0 0.0
    %623 = vmatprep.subr.mxu0 0.0
    %624 = vmatpush1.msra.mxu0 0.0
    %625 = vmatprep.subr.mxu0 0.0
    %626 = vmatpush1.msra.mxu0 0.0
    %627 = vmatprep.subr.mxu0 0.0
    %628 = vmatpush1.msra.mxu0 0.0
    %629 = vmatprep.subr.mxu0 0.0
    %630 = vmatpush1.msra.mxu0 0.0
    %631 = vmatprep.subr.mxu0 0.0
    %632 = vmatpush1.msra.mxu0 0.0
    %633 = vmatprep.subr.mxu0 0.0
    %634 = vmatpush1.msra.mxu0 0.0
    %635 = vmatprep.subr.mxu0 0.0
    %636 = vmatpush1.msra.mxu0 0.0
    %637 = vmatprep.subr.mxu0 0.0
    %638 = vmatpush1.msra.mxu0 0.0
    %639 = vmatprep.subr.mxu0 0.0
    %640 = vmatpush1.msra.mxu0 0.0
    %641 = vmatprep.subr.mxu0 0.0
    %642 = vmatpush1.msra.mxu0 0.0
    %643 = vmatprep.subr.mxu0 0.0
    %644 = vmatpush1.msra.mxu0 0.0
    %645 = vmatprep.subr.mxu0 0.0
    %646 = vmatpush1.msra.mxu0 0.0
    %647 = vmatprep.mubr.f32.mxu0 0.0
    %648 = vmatmul.mubr.f32.gmra.mrb[0].mxu0 %v581
    %v649 = vpop.f32.mrb[0].mxu0
    %v650 = vadd.f32 0.0, %v649
    %v651 = vpop.f32.mrb[0].mxu0
    %652 = vdwg.mxu0
    %v653 = vadd.f32 %v577, %v650
    %v654 = vxor.u32 %v653, 2147483648
    %v655 = vmul.f32 %v654, 1.442695
    %v656 = vpow.pop %v655
    %v657 = vadd.f32 %v656, 1.0
    %v658 = vrcp.pop %v657
    %v659 = vmul.f32 1.0, %v658
    %v660 = vmul.f32 %v23, %v659
    %v661 = vadd.f32 %v660, %v24
    %v662 = vmul.f32 %v661, %v393
    %664 = vrot.lane.b32.xlu0 %v661, 64
    %v665 = vpop.permute.xlu0 %664
    %v667 = vmul.f32 %v661, %v665
    %669 = vrot.lane.b32.xlu0 %v667, 32
    %v670 = vpop.permute.xlu0 %669
    %v672 = vadd.f32 %v662, %v670
    %v673 = vtanh.pop %v672
    %675 = vrot.lane.b32.xlu0 %v673, 64
    %v676 = vpop.permute.xlu0 %675
    %v678 = vmul.f32 %v661, %v676
    %v679 = vsel %vm44, %v574, 0
    %681 = vmatprep.subr.mxu0 0.0
    %682 = vmatpush1.msra.mxu0 %v187
    %683 = vmatprep.subr.mxu0 0.0
    %684 = vmatpush1.msra.mxu0 %v188
    %685 = vmatprep.subr.mxu0 0.0
    %686 = vmatpush1.msra.mxu0 %v189
    %687 = vmatprep.subr.mxu0 0.0
    %688 = vmatpush1.msra.mxu0 %v190
    %689 = vmatprep.subr.mxu0 0.0
    %690 = vmatpush1.msra.mxu0 0.0
    %691 = vmatprep.subr.mxu0 0.0
    %692 = vmatpush1.msra.mxu0 0.0
    %693 = vmatprep.subr.mxu0 0.0
    %694 = vmatpush1.msra.mxu0 0.0
    %695 = vmatprep.subr.mxu0 0.0
    %696 = vmatpush1.msra.mxu0 0.0
    %697 = vmatprep.subr.mxu0 0.0
    %698 = vmatpush1.msra.mxu0 0.0
    %699 = vmatprep.subr.mxu0 0.0
    %700 = vmatpush1.msra.mxu0 0.0
    %701 = vmatprep.subr.mxu0 0.0
    %702 = vmatpush1.msra.mxu0 0.0
    %703 = vmatprep.subr.mxu0 0.0
    %704 = vmatpush1.msra.mxu0 0.0
    %705 = vmatprep.subr.mxu0 0.0
    %706 = vmatpush1.msra.mxu0 0.0
    %707 = vmatprep.subr.mxu0 0.0
    %708 = vmatpush1.msra.mxu0 0.0
    %709 = vmatprep.subr.mxu0 0.0
    %710 = vmatpush1.msra.mxu0 0.0
    %711 = vmatprep.subr.mxu0 0.0
    %712 = vmatpush1.msra.mxu0 0.0
    %713 = vmatprep.subr.mxu0 0.0
    %714 = vmatpush1.msra.mxu0 0.0
    %715 = vmatprep.subr.mxu0 0.0
    %716 = vmatpush1.msra.mxu0 0.0
    %717 = vmatprep.subr.mxu0 0.0
    %718 = vmatpush1.msra.mxu0 0.0
    %719 = vmatprep.subr.mxu0 0.0
    %720 = vmatpush1.msra.mxu0 0.0
    %721 = vmatprep.subr.mxu0 0.0
    %722 = vmatpush1.msra.mxu0 0.0
    %723 = vmatprep.subr.mxu0 0.0
    %724 = vmatpush1.msra.mxu0 0.0
    %725 = vmatprep.subr.mxu0 0.0
    %726 = vmatpush1.msra.mxu0 0.0
    %727 = vmatprep.subr.mxu0 0.0
    %728 = vmatpush1.msra.mxu0 0.0
    %729 = vmatprep.subr.mxu0 0.0
    %730 = vmatpush1.msra.mxu0 0.0
    %731 = vmatprep.subr.mxu0 0.0
    %732 = vmatpush1.msra.mxu0 0.0
    %733 = vmatprep.subr.mxu0 0.0
    %734 = vmatpush1.msra.mxu0 0.0
    %735 = vmatprep.subr.mxu0 0.0
    %736 = vmatpush1.msra.mxu0 0.0
    %737 = vmatprep.subr.mxu0 0.0
    %738 = vmatpush1.msra.mxu0 0.0
    %739 = vmatprep.subr.mxu0 0.0
    %740 = vmatpush1.msra.mxu0 0.0
    %741 = vmatprep.subr.mxu0 0.0
    %742 = vmatpush1.msra.mxu0 0.0
    %743 = vmatprep.subr.mxu0 0.0
    %744 = vmatpush1.msra.mxu0 0.0
    %745 = vmatprep.mubr.f32.mxu0 0.0
    %746 = vmatmul.mubr.f32.gmra.mrb[0].mxu0 %v679
    %v747 = vpop.f32.mrb[0].mxu0
    %v748 = vadd.f32 0.0, %v747
    %v749 = vpop.f32.mrb[0].mxu0
    %750 = vdwg.mxu0
    %751 = vmatprep.subr.mxu0 0.0
    %752 = vmatpush1.msra.mxu0 %v192
    %753 = vmatprep.subr.mxu0 0.0
    %754 = vmatpush1.msra.mxu0 %v193
    %755 = vmatprep.subr.mxu0 0.0
    %756 = vmatpush1.msra.mxu0 %v194
    %757 = vmatprep.subr.mxu0 0.0
    %758 = vmatpush1.msra.mxu0 %v195
    %759 = vmatprep.subr.mxu0 0.0
    %760 = vmatpush1.msra.mxu0 0.0
    %761 = vmatprep.subr.mxu0 0.0
    %762 = vmatpush1.msra.mxu0 0.0
    %763 = vmatprep.subr.mxu0 0.0
    %764 = vmatpush1.msra.mxu0 0.0
    %765 = vmatprep.subr.mxu0 0.0
    %766 = vmatpush1.msra.mxu0 0.0
    %767 = vmatprep.subr.mxu0 0.0
    %768 = vmatpush1.msra.mxu0 0.0
    %769 = vmatprep.subr.mxu0 0.0
    %770 = vmatpush1.msra.mxu0 0.0
    %771 = vmatprep.subr.mxu0 0.0
    %772 = vmatpush1.msra.mxu0 0.0
    %773 = vmatprep.subr.mxu0 0.0
    %774 = vmatpush1.msra.mxu0 0.0
    %775 = vmatprep.subr.mxu0 0.0
    %776 = vmatpush1.msra.mxu0 0.0
    %777 = vmatprep.subr.mxu0 0.0
    %778 = vmatpush1.msra.mxu0 0.0
    %779 = vmatprep.subr.mxu0 0.0
    %780 = vmatpush1.msra.mxu0 0.0
    %781 = vmatprep.subr.mxu0 0.0
    %782 = vmatpush1.msra.mxu0 0.0
    %783 = vmatprep.subr.mxu0 0.0
    %784 = vmatpush1.msra.mxu0 0.0
    %785 = vmatprep.subr.mxu0 0.0
    %786 = vmatpush1.msra.mxu0 0.0
    %787 = vmatprep.subr.mxu0 0.0
    %788 = vmatpush1.msra.mxu0 0.0
    %789 = vmatprep.subr.mxu0 0.0
    %790 = vmatpush1.msra.mxu0 0.0
    %791 = vmatprep.subr.mxu0 0.0
    %792 = vmatpush1.msra.mxu0 0.0
    %793 = vmatprep.subr.mxu0 0.0
    %794 = vmatpush1.msra.mxu0 0.0
    %795 = vmatprep.subr.mxu0 0.0
    %796 = vmatpush1.msra.mxu0 0.0
    %797 = vmatprep.subr.mxu0 0.0
    %798 = vmatpush1.msra.mxu0 0.0
    %799 = vmatprep.subr.mxu0 0.0
    %800 = vmatpush1.msra.mxu0 0.0
    %801 = vmatprep.subr.mxu0 0.0
    %802 = vmatpush1.msra.mxu0 0.0
    %803 = vmatprep.subr.mxu0 0.0
    %804 = vmatpush1.msra.mxu0 0.0
    %805 = vmatprep.subr.mxu0 0.0
    %806 = vmatpush1.msra.mxu0 0.0
    %807 = vmatprep.subr.mxu0 0.0
    %808 = vmatpush1.msra.mxu0 0.0
    %809 = vmatprep.subr.mxu0 0.0
    %810 = vmatpush1.msra.mxu0 0.0
    %811 = vmatprep.subr.mxu0 0.0
    %812 = vmatpush1.msra.mxu0 0.0
    %813 = vmatprep.subr.mxu0 0.0
    %814 = vmatpush1.msra.mxu0 0.0
    %815 = vmatprep.mubr.f32.mxu0 0.0
    %816 = vmatmul.mubr.f32.gmra.mrb[0].mxu0 %v581
    %v817 = vpop.f32.mrb[0].mxu0
    %v818 = vadd.f32 %v748, %v817
    %v819 = vpop.f32.mrb[0].mxu0
    %820 = vdwg.mxu0
    %v821 = vadd.f32 %v818, %v544
    %v822 = vxor.u32 %v821, 2147483648
    %v823 = vmul.f32 %v822, 1.442695
    %v824 = vpow.pop %v823
    %v825 = vadd.f32 %v824, 1.0
    %v826 = vrcp.pop %v825
    %v827 = vmul.f32 1.0, %v826
    %v828 = vmul.f32 %v23, %v827
    %v829 = vadd.f32 %v828, %v24
    %v830 = vmul.f32 %v829, %v565
    %832 = vrot.lane.b32.xlu0 %v829, 64
    %v833 = vpop.permute.xlu0 %832
    %v835 = vmul.f32 %v829, %v833
    %837 = vrot.lane.b32.xlu0 %v835, 32
    %v838 = vpop.permute.xlu0 %837
    %v840 = vadd.f32 %v830, %v838
    %v841 = vtanh.pop %v840
    %843 = vrot.lane.b32.xlu0 %v841, 64
    %v844 = vpop.permute.xlu0 %843
    %v846 = vmul.f32 %v829, %v844
    %848 = vrot.lane.b32.xlu0 %v846, 32
    %v849 = vpop.permute.xlu0 %848
    %851 = vst.msk [vmem:[#allocation3 + $0x8] sm:$0xff] %vm44, %v849
    %v852 = vld [vmem:[#allocation2 + $0x18] sm:$0xff]
    %854 = vrot.lane.b32.xlu0 %v678, 32
    %v855 = vpop.permute.xlu0 %854
    %v856 = vsel %vm44, %v855, 0
    %858 = vmatprep.subr.mxu0 0.0
    %859 = vmatpush1.msra.mxu0 %v182
    %860 = vmatprep.subr.mxu0 0.0
    %861 = vmatpush1.msra.mxu0 %v183
    %862 = vmatprep.subr.mxu0 0.0
    %863 = vmatpush1.msra.mxu0 %v184
    %864 = vmatprep.subr.mxu0 0.0
    %865 = vmatpush1.msra.mxu0 %v185
    %866 = vmatprep.subr.mxu0 0.0
    %867 = vmatpush1.msra.mxu0 0.0
    %868 = vmatprep.subr.mxu0 0.0
    %869 = vmatpush1.msra.mxu0 0.0
    %870 = vmatprep.subr.mxu0 0.0
    %871 = vmatpush1.msra.mxu0 0.0
    %872 = vmatprep.subr.mxu0 0.0
    %873 = vmatpush1.msra.mxu0 0.0
    %874 = vmatprep.subr.mxu0 0.0
    %875 = vmatpush1.msra.mxu0 0.0
    %876 = vmatprep.subr.mxu0 0.0
    %877 = vmatpush1.msra.mxu0 0.0
    %878 = vmatprep.subr.mxu0 0.0
    %879 = vmatpush1.msra.mxu0 0.0
    %880 = vmatprep.subr.mxu0 0.0
    %881 = vmatpush1.msra.mxu0 0.0
    %882 = vmatprep.subr.mxu0 0.0
    %883 = vmatpush1.msra.mxu0 0.0
    %884 = vmatprep.subr.mxu0 0.0
    %885 = vmatpush1.msra.mxu0 0.0
    %886 = vmatprep.subr.mxu0 0.0
    %887 = vmatpush1.msra.mxu0 0.0
    %888 = vmatprep.subr.mxu0 0.0
    %889 = vmatpush1.msra.mxu0 0.0
    %890 = vmatprep.subr.mxu0 0.0
    %891 = vmatpush1.msra.mxu0 0.0
    %892 = vmatprep.subr.mxu0 0.0
    %893 = vmatpush1.msra.mxu0 0.0
    %894 = vmatprep.subr.mxu0 0.0
    %895 = vmatpush1.msra.mxu0 0.0
    %896 = vmatprep.subr.mxu0 0.0
    %897 = vmatpush1.msra.mxu0 0.0
    %898 = vmatprep.subr.mxu0 0.0
    %899 = vmatpush1.msra.mxu0 0.0
    %900 = vmatprep.subr.mxu0 0.0
    %901 = vmatpush1.msra.mxu0 0.0
    %902 = vmatprep.subr.mxu0 0.0
    %903 = vmatpush1.msra.mxu0 0.0
    %904 = vmatprep.subr.mxu0 0.0
    %905 = vmatpush1.msra.mxu0 0.0
    %906 = vmatprep.subr.mxu0 0.0
    %907 = vmatpush1.msra.mxu0 0.0
    %908 = vmatprep.subr.mxu0 0.0
    %909 = vmatpush1.msra.mxu0 0.0
    %910 = vmatprep.subr.mxu0 0.0
    %911 = vmatpush1.msra.mxu0 0.0
    %912 = vmatprep.subr.mxu0 0.0
    %913 = vmatpush1.msra.mxu0 0.0
    %914 = vmatprep.subr.mxu0 0.0
    %915 = vmatpush1.msra.mxu0 0.0
    %916 = vmatprep.subr.mxu0 0.0
    %917 = vmatpush1.msra.mxu0 0.0
    %918 = vmatprep.subr.mxu0 0.0
    %919 = vmatpush1.msra.mxu0 0.0
    %920 = vmatprep.subr.mxu0 0.0
    %921 = vmatpush1.msra.mxu0 0.0
    %922 = vmatprep.mubr.f32.mxu0 0.0
    %923 = vmatmul.mubr.f32.gmra.mrb[0].mxu0 %v856
    %v924 = vpop.f32.mrb[0].mxu0
    %v925 = vadd.f32 0.0, %v924
    %v926 = vpop.f32.mrb[0].mxu0
    %927 = vdwg.mxu0
    %v928 = vadd.f32 %v852, %v925
    %v929 = vxor.u32 %v928, 2147483648
    %v930 = vmul.f32 %v929, 1.442695
    %v931 = vpow.pop %v930
    %v932 = vadd.f32 %v931, 1.0
    %v933 = vrcp.pop %v932
    %v934 = vmul.f32 1.0, %v933
    %v935 = vmul.f32 %v23, %v934
    %v936 = vadd.f32 %v935, %v24
    %v937 = vmul.f32 %v936, %v672
    %939 = vrot.lane.b32.xlu0 %v936, 64
    %v940 = vpop.permute.xlu0 %939
    %v942 = vmul.f32 %v936, %v940
    %944 = vrot.lane.b32.xlu0 %v942, 32
    %v945 = vpop.permute.xlu0 %944
    %v947 = vadd.f32 %v937, %v945
    %v948 = vtanh.pop %v947
    %950 = vrot.lane.b32.xlu0 %v948, 64
    %v951 = vpop.permute.xlu0 %950
    %v953 = vmul.f32 %v936, %v951
    %v954 = vsel %vm44, %v849, 0
    %956 = vmatprep.subr.mxu0 0.0
    %957 = vmatpush1.msra.mxu0 %v187
    %958 = vmatprep.subr.mxu0 0.0
    %959 = vmatpush1.msra.mxu0 %v188
    %960 = vmatprep.subr.mxu0 0.0
    %961 = vmatpush1.msra.mxu0 %v189
    %962 = vmatprep.subr.mxu0 0.0
    %963 = vmatpush1.msra.mxu0 %v190
    %964 = vmatprep.subr.mxu0 0.0
    %965 = vmatpush1.msra.mxu0 0.0
    %966 = vmatprep.subr.mxu0 0.0
    %967 = vmatpush1.msra.mxu0 0.0
    %968 = vmatprep.subr.mxu0 0.0
    %969 = vmatpush1.msra.mxu0 0.0
    %970 = vmatprep.subr.mxu0 0.0
    %971 = vmatpush1.msra.mxu0 0.0
    %972 = vmatprep.subr.mxu0 0.0
    %973 = vmatpush1.msra.mxu0 0.0
    %974 = vmatprep.subr.mxu0 0.0
    %975 = vmatpush1.msra.mxu0 0.0
    %976 = vmatprep.subr.mxu0 0.0
    %977 = vmatpush1.msra.mxu0 0.0
    %978 = vmatprep.subr.mxu0 0.0
    %979 = vmatpush1.msra.mxu0 0.0
    %980 = vmatprep.subr.mxu0 0.0
    %981 = vmatpush1.msra.mxu0 0.0
    %982 = vmatprep.subr.mxu0 0.0
    %983 = vmatpush1.msra.mxu0 0.0
    %984 = vmatprep.subr.mxu0 0.0
    %985 = vmatpush1.msra.mxu0 0.0
    %986 = vmatprep.subr.mxu0 0.0
    %987 = vmatpush1.msra.mxu0 0.0
    %988 = vmatprep.subr.mxu0 0.0
    %989 = vmatpush1.msra.mxu0 0.0
    %990 = vmatprep.subr.mxu0 0.0
    %991 = vmatpush1.msra.mxu0 0.0
    %992 = vmatprep.subr.mxu0 0.0
    %993 = vmatpush1.msra.mxu0 0.0
    %994 = vmatprep.subr.mxu0 0.0
    %995 = vmatpush1.msra.mxu0 0.0
    %996 = vmatprep.subr.mxu0 0.0
    %997 = vmatpush1.msra.mxu0 0.0
    %998 = vmatprep.subr.mxu0 0.0
    %999 = vmatpush1.msra.mxu0 0.0
    %1000 = vmatprep.subr.mxu0 0.0
    %1001 = vmatpush1.msra.mxu0 0.0
    %1002 = vmatprep.subr.mxu0 0.0
    %1003 = vmatpush1.msra.mxu0 0.0
    %1004 = vmatprep.subr.mxu0 0.0
    %1005 = vmatpush1.msra.mxu0 0.0
    %1006 = vmatprep.subr.mxu0 0.0
    %1007 = vmatpush1.msra.mxu0 0.0
    %1008 = vmatprep.subr.mxu0 0.0
    %1009 = vmatpush1.msra.mxu0 0.0
    %1010 = vmatprep.subr.mxu0 0.0
    %1011 = vmatpush1.msra.mxu0 0.0
    %1012 = vmatprep.subr.mxu0 0.0
    %1013 = vmatpush1.msra.mxu0 0.0
    %1014 = vmatprep.subr.mxu0 0.0
    %1015 = vmatpush1.msra.mxu0 0.0
    %1016 = vmatprep.subr.mxu0 0.0
    %1017 = vmatpush1.msra.mxu0 0.0
    %1018 = vmatprep.subr.mxu0 0.0
    %1019 = vmatpush1.msra.mxu0 0.0
    %1020 = vmatprep.mubr.f32.mxu0 0.0
    %1021 = vmatmul.mubr.f32.gmra.mrb[0].mxu0 %v954
    %v1022 = vpop.f32.mrb[0].mxu0
    %v1023 = vadd.f32 0.0, %v1022
    %v1024 = vpop.f32.mrb[0].mxu0
    %1025 = vdwg.mxu0
    %1026 = vmatprep.subr.mxu0 0.0
    %1027 = vmatpush1.msra.mxu0 %v192
    %1028 = vmatprep.subr.mxu0 0.0
    %1029 = vmatpush1.msra.mxu0 %v193
    %1030 = vmatprep.subr.mxu0 0.0
    %1031 = vmatpush1.msra.mxu0 %v194
    %1032 = vmatprep.subr.mxu0 0.0
    %1033 = vmatpush1.msra.mxu0 %v195
    %1034 = vmatprep.subr.mxu0 0.0
    %1035 = vmatpush1.msra.mxu0 0.0
    %1036 = vmatprep.subr.mxu0 0.0
    %1037 = vmatpush1.msra.mxu0 0.0
    %1038 = vmatprep.subr.mxu0 0.0
    %1039 = vmatpush1.msra.mxu0 0.0
    %1040 = vmatprep.subr.mxu0 0.0
    %1041 = vmatpush1.msra.mxu0 0.0
    %1042 = vmatprep.subr.mxu0 0.0
    %1043 = vmatpush1.msra.mxu0 0.0
    %1044 = vmatprep.subr.mxu0 0.0
    %1045 = vmatpush1.msra.mxu0 0.0
    %1046 = vmatprep.subr.mxu0 0.0
    %1047 = vmatpush1.msra.mxu0 0.0
    %1048 = vmatprep.subr.mxu0 0.0
    %1049 = vmatpush1.msra.mxu0 0.0
    %1050 = vmatprep.subr.mxu0 0.0
    %1051 = vmatpush1.msra.mxu0 0.0
    %1052 = vmatprep.subr.mxu0 0.0
    %1053 = vmatpush1.msra.mxu0 0.0
    %1054 = vmatprep.subr.mxu0 0.0
    %1055 = vmatpush1.msra.mxu0 0.0
    %1056 = vmatprep.subr.mxu0 0.0
    %1057 = vmatpush1.msra.mxu0 0.0
    %1058 = vmatprep.subr.mxu0 0.0
    %1059 = vmatpush1.msra.mxu0 0.0
    %1060 = vmatprep.subr.mxu0 0.0
    %1061 = vmatpush1.msra.mxu0 0.0
    %1062 = vmatprep.subr.mxu0 0.0
    %1063 = vmatpush1.msra.mxu0 0.0
    %1064 = vmatprep.subr.mxu0 0.0
    %1065 = vmatpush1.msra.mxu0 0.0
    %1066 = vmatprep.subr.mxu0 0.0
    %1067 = vmatpush1.msra.mxu0 0.0
    %1068 = vmatprep.subr.mxu0 0.0
    %1069 = vmatpush1.msra.mxu0 0.0
    %1070 = vmatprep.subr.mxu0 0.0
    %1071 = vmatpush1.msra.mxu0 0.0
    %1072 = vmatprep.subr.mxu0 0.0
    %1073 = vmatpush1.msra.mxu0 0.0
    %1074 = vmatprep.subr.mxu0 0.0
    %1075 = vmatpush1.msra.mxu0 0.0
    %1076 = vmatprep.subr.mxu0 0.0
    %1077 = vmatpush1.msra.mxu0 0.0
    %1078 = vmatprep.subr.mxu0 0.0
    %1079 = vmatpush1.msra.mxu0 0.0
    %1080 = vmatprep.subr.mxu0 0.0
    %1081 = vmatpush1.msra.mxu0 0.0
    %1082 = vmatprep.subr.mxu0 0.0
    %1083 = vmatpush1.msra.mxu0 0.0
    %1084 = vmatprep.subr.mxu0 0.0
    %1085 = vmatpush1.msra.mxu0 0.0
    %1086 = vmatprep.subr.mxu0 0.0
    %1087 = vmatpush1.msra.mxu0 0.0
    %1088 = vmatprep.subr.mxu0 0.0
    %1089 = vmatpush1.msra.mxu0 0.0
    %1090 = vmatprep.mubr.f32.mxu0 0.0
    %1091 = vmatmul.mubr.f32.gmra.mrb[0].mxu0 %v856
    %v1092 = vpop.f32.mrb[0].mxu0
    %v1093 = vadd.f32 %v1023, %v1092
    %v1094 = vpop.f32.mrb[0].mxu0
    %1095 = vdwg.mxu0
    %v1096 = vadd.f32 %v1093, %v544
    %v1097 = vxor.u32 %v1096, 2147483648
    %v1098 = vmul.f32 %v1097, 1.442695
    %v1099 = vpow.pop %v1098
    %v1100 = vadd.f32 %v1099, 1.0
    %v1101 = vrcp.pop %v1100
    %v1102 = vmul.f32 1.0, %v1101
    %v1103 = vmul.f32 %v23, %v1102
    %v1104 = vadd.f32 %v1103, %v24
    %v1105 = vmul.f32 %v1104, %v840
    %1107 = vrot.lane.b32.xlu0 %v1104, 64
    %v1108 = vpop.permute.xlu0 %1107
    %v1110 = vmul.f32 %v1104, %v1108
    %1112 = vrot.lane.b32.xlu0 %v1110, 32
    %v1113 = vpop.permute.xlu0 %1112
    %v1115 = vadd.f32 %v1105, %v1113
    %v1116 = vtanh.pop %v1115
    %1118 = vrot.lane.b32.xlu0 %v1116, 64
    %v1119 = vpop.permute.xlu0 %1118
    %v1121 = vmul.f32 %v1104, %v1119
    %1123 = vrot.lane.b32.xlu0 %v1121, 32
    %v1124 = vpop.permute.xlu0 %1123
    %1126 = vst.msk [vmem:[#allocation3 + $0x10] sm:$0xff] %vm44, %v1124
    %v1127 = vld [vmem:[#allocation2 + $0x20] sm:$0xff]
    %1129 = vrot.lane.b32.xlu0 %v953, 32
    %v1130 = vpop.permute.xlu0 %1129
    %v1131 = vsel %vm44, %v1130, 0
    %1133 = vmatprep.subr.mxu0 0.0
    %1134 = vmatpush1.msra.mxu0 %v182
    %1135 = vmatprep.subr.mxu0 0.0
    %1136 = vmatpush1.msra.mxu0 %v183
    %1137 = vmatprep.subr.mxu0 0.0
    %1138 = vmatpush1.msra.mxu0 %v184
    %1139 = vmatprep.subr.mxu0 0.0
    %1140 = vmatpush1.msra.mxu0 %v185
    %1141 = vmatprep.subr.mxu0 0.0
    %1142 = vmatpush1.msra.mxu0 0.0
    %1143 = vmatprep.subr.mxu0 0.0
    %1144 = vmatpush1.msra.mxu0 0.0
    %1145 = vmatprep.subr.mxu0 0.0
    %1146 = vmatpush1.msra.mxu0 0.0
    %1147 = vmatprep.subr.mxu0 0.0
    %1148 = vmatpush1.msra.mxu0 0.0
    %1149 = vmatprep.subr.mxu0 0.0
    %1150 = vmatpush1.msra.mxu0 0.0
    %1151 = vmatprep.subr.mxu0 0.0
    %1152 = vmatpush1.msra.mxu0 0.0
    %1153 = vmatprep.subr.mxu0 0.0
    %1154 = vmatpush1.msra.mxu0 0.0
    %1155 = vmatprep.subr.mxu0 0.0
    %1156 = vmatpush1.msra.mxu0 0.0
    %1157 = vmatprep.subr.mxu0 0.0
    %1158 = vmatpush1.msra.mxu0 0.0
    %1159 = vmatprep.subr.mxu0 0.0
    %1160 = vmatpush1.msra.mxu0 0.0
    %1161 = vmatprep.subr.mxu0 0.0
    %1162 = vmatpush1.msra.mxu0 0.0
    %1163 = vmatprep.subr.mxu0 0.0
    %1164 = vmatpush1.msra.mxu0 0.0
    %1165 = vmatprep.subr.mxu0 0.0
    %1166 = vmatpush1.msra.mxu0 0.0
    %1167 = vmatprep.subr.mxu0 0.0
    %1168 = vmatpush1.msra.mxu0 0.0
    %1169 = vmatprep.subr.mxu0 0.0
    %1170 = vmatpush1.msra.mxu0 0.0
    %1171 = vmatprep.subr.mxu0 0.0
    %1172 = vmatpush1.msra.mxu0 0.0
    %1173 = vmatprep.subr.mxu0 0.0
    %1174 = vmatpush1.msra.mxu0 0.0
    %1175 = vmatprep.subr.mxu0 0.0
    %1176 = vmatpush1.msra.mxu0 0.0
    %1177 = vmatprep.subr.mxu0 0.0
    %1178 = vmatpush1.msra.mxu0 0.0
    %1179 = vmatprep.subr.mxu0 0.0
    %1180 = vmatpush1.msra.mxu0 0.0
    %1181 = vmatprep.subr.mxu0 0.0
    %1182 = vmatpush1.msra.mxu0 0.0
    %1183 = vmatprep.subr.mxu0 0.0
    %1184 = vmatpush1.msra.mxu0 0.0
    %1185 = vmatprep.subr.mxu0 0.0
    %1186 = vmatpush1.msra.mxu0 0.0
    %1187 = vmatprep.subr.mxu0 0.0
    %1188 = vmatpush1.msra.mxu0 0.0
    %1189 = vmatprep.subr.mxu0 0.0
    %1190 = vmatpush1.msra.mxu0 0.0
    %1191 = vmatprep.subr.mxu0 0.0
    %1192 = vmatpush1.msra.mxu0 0.0
    %1193 = vmatprep.subr.mxu0 0.0
    %1194 = vmatpush1.msra.mxu0 0.0
    %1195 = vmatprep.subr.mxu0 0.0
    %1196 = vmatpush1.msra.mxu0 0.0
    %1197 = vmatprep.mubr.f32.mxu0 0.0
    %1198 = vmatmul.mubr.f32.gmra.mrb[0].mxu0 %v1131
    %v1199 = vpop.f32.mrb[0].mxu0
    %v1200 = vadd.f32 0.0, %v1199
    %v1201 = vpop.f32.mrb[0].mxu0
    %1202 = vdwg.mxu0
    %v1203 = vadd.f32 %v1127, %v1200
    %v1204 = vxor.u32 %v1203, 2147483648
    %v1205 = vmul.f32 %v1204, 1.442695
    %v1206 = vpow.pop %v1205
    %v1207 = vadd.f32 %v1206, 1.0
    %v1208 = vrcp.pop %v1207
    %v1209 = vmul.f32 1.0, %v1208
    %v1210 = vmul.f32 %v23, %v1209
    %v1211 = vadd.f32 %v1210, %v24
    %v1212 = vmul.f32 %v1211, %v947
    %1214 = vrot.lane.b32.xlu0 %v1211, 64
    %v1215 = vpop.permute.xlu0 %1214
    %v1217 = vmul.f32 %v1211, %v1215
    %1219 = vrot.lane.b32.xlu0 %v1217, 32
    %v1220 = vpop.permute.xlu0 %1219
    %v1222 = vadd.f32 %v1212, %v1220
    %v1223 = vtanh.pop %v1222
    %1225 = vrot.lane.b32.xlu0 %v1223, 64
    %v1226 = vpop.permute.xlu0 %1225
    %v1228 = vmul.f32 %v1211, %v1226
    %v1229 = vsel %vm44, %v1124, 0
    %1231 = vmatprep.subr.mxu0 0.0
    %1232 = vmatpush1.msra.mxu0 %v187
    %1233 = vmatprep.subr.mxu0 0.0
    %1234 = vmatpush1.msra.mxu0 %v188
    %1235 = vmatprep.subr.mxu0 0.0
    %1236 = vmatpush1.msra.mxu0 %v189
    %1237 = vmatprep.subr.mxu0 0.0
    %1238 = vmatpush1.msra.mxu0 %v190
    %1239 = vmatprep.subr.mxu0 0.0
    %1240 = vmatpush1.msra.mxu0 0.0
    %1241 = vmatprep.subr.mxu0 0.0
    %1242 = vmatpush1.msra.mxu0 0.0
    %1243 = vmatprep.subr.mxu0 0.0
    %1244 = vmatpush1.msra.mxu0 0.0
    %1245 = vmatprep.subr.mxu0 0.0
    %1246 = vmatpush1.msra.mxu0 0.0
    %1247 = vmatprep.subr.mxu0 0.0
    %1248 = vmatpush1.msra.mxu0 0.0
    %1249 = vmatprep.subr.mxu0 0.0
    %1250 = vmatpush1.msra.mxu0 0.0
    %1251 = vmatprep.subr.mxu0 0.0
    %1252 = vmatpush1.msra.mxu0 0.0
    %1253 = vmatprep.subr.mxu0 0.0
    %1254 = vmatpush1.msra.mxu0 0.0
    %1255 = vmatprep.subr.mxu0 0.0
    %1256 = vmatpush1.msra.mxu0 0.0
    %1257 = vmatprep.subr.mxu0 0.0
    %1258 = vmatpush1.msra.mxu0 0.0
    %1259 = vmatprep.subr.mxu0 0.0
    %1260 = vmatpush1.msra.mxu0 0.0
    %1261 = vmatprep.subr.mxu0 0.0
    %1262 = vmatpush1.msra.mxu0 0.0
    %1263 = vmatprep.subr.mxu0 0.0
    %1264 = vmatpush1.msra.mxu0 0.0
    %1265 = vmatprep.subr.mxu0 0.0
    %1266 = vmatpush1.msra.mxu0 0.0
    %1267 = vmatprep.subr.mxu0 0.0
    %1268 = vmatpush1.msra.mxu0 0.0
    %1269 = vmatprep.subr.mxu0 0.0
    %1270 = vmatpush1.msra.mxu0 0.0
    %1271 = vmatprep.subr.mxu0 0.0
    %1272 = vmatpush1.msra.mxu0 0.0
    %1273 = vmatprep.subr.mxu0 0.0
    %1274 = vmatpush1.msra.mxu0 0.0
    %1275 = vmatprep.subr.mxu0 0.0
    %1276 = vmatpush1.msra.mxu0 0.0
    %1277 = vmatprep.subr.mxu0 0.0
    %1278 = vmatpush1.msra.mxu0 0.0
    %1279 = vmatprep.subr.mxu0 0.0
    %1280 = vmatpush1.msra.mxu0 0.0
    %1281 = vmatprep.subr.mxu0 0.0
    %1282 = vmatpush1.msra.mxu0 0.0
    %1283 = vmatprep.subr.mxu0 0.0
    %1284 = vmatpush1.msra.mxu0 0.0
    %1285 = vmatprep.subr.mxu0 0.0
    %1286 = vmatpush1.msra.mxu0 0.0
    %1287 = vmatprep.subr.mxu0 0.0
    %1288 = vmatpush1.msra.mxu0 0.0
    %1289 = vmatprep.subr.mxu0 0.0
    %1290 = vmatpush1.msra.mxu0 0.0
    %1291 = vmatprep.subr.mxu0 0.0
    %1292 = vmatpush1.msra.mxu0 0.0
    %1293 = vmatprep.subr.mxu0 0.0
    %1294 = vmatpush1.msra.mxu0 0.0
    %1295 = vmatprep.mubr.f32.mxu0 0.0
    %1296 = vmatmul.mubr.f32.gmra.mrb[0].mxu0 %v1229
    %v1297 = vpop.f32.mrb[0].mxu0
    %v1298 = vadd.f32 0.0, %v1297
    %v1299 = vpop.f32.mrb[0].mxu0
    %1300 = vdwg.mxu0
    %1301 = vmatprep.subr.mxu0 0.0
    %1302 = vmatpush1.msra.mxu0 %v192
    %1303 = vmatprep.subr.mxu0 0.0
    %1304 = vmatpush1.msra.mxu0 %v193
    %1305 = vmatprep.subr.mxu0 0.0
    %1306 = vmatpush1.msra.mxu0 %v194
    %1307 = vmatprep.subr.mxu0 0.0
    %1308 = vmatpush1.msra.mxu0 %v195
    %1309 = vmatprep.subr.mxu0 0.0
    %1310 = vmatpush1.msra.mxu0 0.0
    %1311 = vmatprep.subr.mxu0 0.0
    %1312 = vmatpush1.msra.mxu0 0.0
    %1313 = vmatprep.subr.mxu0 0.0
    %1314 = vmatpush1.msra.mxu0 0.0
    %1315 = vmatprep.subr.mxu0 0.0
    %1316 = vmatpush1.msra.mxu0 0.0
    %1317 = vmatprep.subr.mxu0 0.0
    %1318 = vmatpush1.msra.mxu0 0.0
    %1319 = vmatprep.subr.mxu0 0.0
    %1320 = vmatpush1.msra.mxu0 0.0
    %1321 = vmatprep.subr.mxu0 0.0
    %1322 = vmatpush1.msra.mxu0 0.0
    %1323 = vmatprep.subr.mxu0 0.0
    %1324 = vmatpush1.msra.mxu0 0.0
    %1325 = vmatprep.subr.mxu0 0.0
    %1326 = vmatpush1.msra.mxu0 0.0
    %1327 = vmatprep.subr.mxu0 0.0
    %1328 = vmatpush1.msra.mxu0 0.0
    %1329 = vmatprep.subr.mxu0 0.0
    %1330 = vmatpush1.msra.mxu0 0.0
    %1331 = vmatprep.subr.mxu0 0.0
    %1332 = vmatpush1.msra.mxu0 0.0
    %1333 = vmatprep.subr.mxu0 0.0
    %1334 = vmatpush1.msra.mxu0 0.0
    %1335 = vmatprep.subr.mxu0 0.0
    %1336 = vmatpush1.msra.mxu0 0.0
    %1337 = vmatprep.subr.mxu0 0.0
    %1338 = vmatpush1.msra.mxu0 0.0
    %1339 = vmatprep.subr.mxu0 0.0
    %1340 = vmatpush1.msra.mxu0 0.0
    %1341 = vmatprep.subr.mxu0 0.0
    %1342 = vmatpush1.msra.mxu0 0.0
    %1343 = vmatprep.subr.mxu0 0.0
    %1344 = vmatpush1.msra.mxu0 0.0
    %1345 = vmatprep.subr.mxu0 0.0
    %1346 = vmatpush1.msra.mxu0 0.0
    %1347 = vmatprep.subr.mxu0 0.0
    %1348 = vmatpush1.msra.mxu0 0.0
    %1349 = vmatprep.subr.mxu0 0.0
    %1350 = vmatpush1.msra.mxu0 0.0
    %1351 = vmatprep.subr.mxu0 0.0
    %1352 = vmatpush1.msra.mxu0 0.0
    %1353 = vmatprep.subr.mxu0 0.0
    %1354 = vmatpush1.msra.mxu0 0.0
    %1355 = vmatprep.subr.mxu0 0.0
    %1356 = vmatpush1.msra.mxu0 0.0
    %1357 = vmatprep.subr.mxu0 0.0
    %1358 = vmatpush1.msra.mxu0 0.0
    %1359 = vmatprep.subr.mxu0 0.0
    %1360 = vmatpush1.msra.mxu0 0.0
    %1361 = vmatprep.subr.mxu0 0.0
    %1362 = vmatpush1.msra.mxu0 0.0
    %1363 = vmatprep.subr.mxu0 0.0
    %1364 = vmatpush1.msra.mxu0 0.0
    %1365 = vmatprep.mubr.f32.mxu0 0.0
    %1366 = vmatmul.mubr.f32.gmra.mrb[0].mxu0 %v1131
    %v1367 = vpop.f32.mrb[0].mxu0
    %v1368 = vadd.f32 %v1298, %v1367
    %v1369 = vpop.f32.mrb[0].mxu0
    %1370 = vdwg.mxu0
    %v1371 = vadd.f32 %v1368, %v544
    %v1372 = vxor.u32 %v1371, 2147483648
    %v1373 = vmul.f32 %v1372, 1.442695
    %v1374 = vpow.pop %v1373
    %v1375 = vadd.f32 %v1374, 1.0
    %v1376 = vrcp.pop %v1375
    %v1377 = vmul.f32 1.0, %v1376
    %v1378 = vmul.f32 %v23, %v1377
    %v1379 = vadd.f32 %v1378, %v24
    %v1380 = vmul.f32 %v1379, %v1115
    %1382 = vrot.lane.b32.xlu0 %v1379, 64
    %v1383 = vpop.permute.xlu0 %1382
    %v1385 = vmul.f32 %v1379, %v1383
    %1387 = vrot.lane.b32.xlu0 %v1385, 32
    %v1388 = vpop.permute.xlu0 %1387
    %v1390 = vadd.f32 %v1380, %v1388
    %v1391 = vtanh.pop %v1390
    %1393 = vrot.lane.b32.xlu0 %v1391, 64
    %v1394 = vpop.permute.xlu0 %1393
    %v1396 = vmul.f32 %v1379, %v1394
    %1398 = vrot.lane.b32.xlu0 %v1396, 32
    %v1399 = vpop.permute.xlu0 %1398
    %1401 = vst.msk [vmem:[#allocation3 + $0x18] sm:$0xff] %vm44, %v1399
    %v1402 = vld [vmem:[#allocation2 + $0x28] sm:$0xff]
    %1404 = vrot.lane.b32.xlu0 %v1228, 32
    %v1405 = vpop.permute.xlu0 %1404
    %v1406 = vsel %vm44, %v1405, 0
    %1408 = vmatprep.subr.mxu0 0.0
    %1409 = vmatpush1.msra.mxu0 %v182
    %1410 = vmatprep.subr.mxu0 0.0
    %1411 = vmatpush1.msra.mxu0 %v183
    %1412 = vmatprep.subr.mxu0 0.0
    %1413 = vmatpush1.msra.mxu0 %v184
    %1414 = vmatprep.subr.mxu0 0.0
    %1415 = vmatpush1.msra.mxu0 %v185
    %1416 = vmatprep.subr.mxu0 0.0
    %1417 = vmatpush1.msra.mxu0 0.0
    %1418 = vmatprep.subr.mxu0 0.0
    %1419 = vmatpush1.msra.mxu0 0.0
    %1420 = vmatprep.subr.mxu0 0.0
    %1421 = vmatpush1.msra.mxu0 0.0
    %1422 = vmatprep.subr.mxu0 0.0
    %1423 = vmatpush1.msra.mxu0 0.0
    %1424 = vmatprep.subr.mxu0 0.0
    %1425 = vmatpush1.msra.mxu0 0.0
    %1426 = vmatprep.subr.mxu0 0.0
    %1427 = vmatpush1.msra.mxu0 0.0
    %1428 = vmatprep.subr.mxu0 0.0
    %1429 = vmatpush1.msra.mxu0 0.0
    %1430 = vmatprep.subr.mxu0 0.0
    %1431 = vmatpush1.msra.mxu0 0.0
    %1432 = vmatprep.subr.mxu0 0.0
    %1433 = vmatpush1.msra.mxu0 0.0
    %1434 = vmatprep.subr.mxu0 0.0
    %1435 = vmatpush1.msra.mxu0 0.0
    %1436 = vmatprep.subr.mxu0 0.0
    %1437 = vmatpush1.msra.mxu0 0.0
    %1438 = vmatprep.subr.mxu0 0.0
    %1439 = vmatpush1.msra.mxu0 0.0
    %1440 = vmatprep.subr.mxu0 0.0
    %1441 = vmatpush1.msra.mxu0 0.0
    %1442 = vmatprep.subr.mxu0 0.0
    %1443 = vmatpush1.msra.mxu0 0.0
    %1444 = vmatprep.subr.mxu0 0.0
    %1445 = vmatpush1.msra.mxu0 0.0
    %1446 = vmatprep.subr.mxu0 0.0
    %1447 = vmatpush1.msra.mxu0 0.0
    %1448 = vmatprep.subr.mxu0 0.0
    %1449 = vmatpush1.msra.mxu0 0.0
    %1450 = vmatprep.subr.mxu0 0.0
    %1451 = vmatpush1.msra.mxu0 0.0
    %1452 = vmatprep.subr.mxu0 0.0
    %1453 = vmatpush1.msra.mxu0 0.0
    %1454 = vmatprep.subr.mxu0 0.0
    %1455 = vmatpush1.msra.mxu0 0.0
    %1456 = vmatprep.subr.mxu0 0.0
    %1457 = vmatpush1.msra.mxu0 0.0
    %1458 = vmatprep.subr.mxu0 0.0
    %1459 = vmatpush1.msra.mxu0 0.0
    %1460 = vmatprep.subr.mxu0 0.0
    %1461 = vmatpush1.msra.mxu0 0.0
    %1462 = vmatprep.subr.mxu0 0.0
    %1463 = vmatpush1.msra.mxu0 0.0
    %1464 = vmatprep.subr.mxu0 0.0
    %1465 = vmatpush1.msra.mxu0 0.0
    %1466 = vmatprep.subr.mxu0 0.0
    %1467 = vmatpush1.msra.mxu0 0.0
    %1468 = vmatprep.subr.mxu0 0.0
    %1469 = vmatpush1.msra.mxu0 0.0
    %1470 = vmatprep.subr.mxu0 0.0
    %1471 = vmatpush1.msra.mxu0 0.0
    %1472 = vmatprep.mubr.f32.mxu0 0.0
    %1473 = vmatmul.mubr.f32.gmra.mrb[0].mxu0 %v1406
    %v1474 = vpop.f32.mrb[0].mxu0
    %v1475 = vadd.f32 0.0, %v1474
    %v1476 = vpop.f32.mrb[0].mxu0
    %1477 = vdwg.mxu0
    %v1478 = vadd.f32 %v1402, %v1475
    %v1479 = vxor.u32 %v1478, 2147483648
    %v1480 = vmul.f32 %v1479, 1.442695
    %v1481 = vpow.pop %v1480
    %v1482 = vadd.f32 %v1481, 1.0
    %v1483 = vrcp.pop %v1482
    %v1484 = vmul.f32 1.0, %v1483
    %v1485 = vmul.f32 %v23, %v1484
    %v1486 = vadd.f32 %v1485, %v24
    %v1487 = vmul.f32 %v1486, %v1222
    %1489 = vrot.lane.b32.xlu0 %v1486, 64
    %v1490 = vpop.permute.xlu0 %1489
    %v1492 = vmul.f32 %v1486, %v1490
    %1494 = vrot.lane.b32.xlu0 %v1492, 32
    %v1495 = vpop.permute.xlu0 %1494
    %v1497 = vadd.f32 %v1487, %v1495
    %v1498 = vtanh.pop %v1497
    %1500 = vrot.lane.b32.xlu0 %v1498, 64
    %v1501 = vpop.permute.xlu0 %1500
    %v1503 = vmul.f32 %v1486, %v1501
    %v1504 = vsel %vm44, %v1399, 0
    %1506 = vmatprep.subr.mxu0 0.0
    %1507 = vmatpush1.msra.mxu0 %v187
    %1508 = vmatprep.subr.mxu0 0.0
    %1509 = vmatpush1.msra.mxu0 %v188
    %1510 = vmatprep.subr.mxu0 0.0
    %1511 = vmatpush1.msra.mxu0 %v189
    %1512 = vmatprep.subr.mxu0 0.0
    %1513 = vmatpush1.msra.mxu0 %v190
    %1514 = vmatprep.subr.mxu0 0.0
    %1515 = vmatpush1.msra.mxu0 0.0
    %1516 = vmatprep.subr.mxu0 0.0
    %1517 = vmatpush1.msra.mxu0 0.0
    %1518 = vmatprep.subr.mxu0 0.0
    %1519 = vmatpush1.msra.mxu0 0.0
    %1520 = vmatprep.subr.mxu0 0.0
    %1521 = vmatpush1.msra.mxu0 0.0
    %1522 = vmatprep.subr.mxu0 0.0
    %1523 = vmatpush1.msra.mxu0 0.0
    %1524 = vmatprep.subr.mxu0 0.0
    %1525 = vmatpush1.msra.mxu0 0.0
    %1526 = vmatprep.subr.mxu0 0.0
    %1527 = vmatpush1.msra.mxu0 0.0
    %1528 = vmatprep.subr.mxu0 0.0
    %1529 = vmatpush1.msra.mxu0 0.0
    %1530 = vmatprep.subr.mxu0 0.0
    %1531 = vmatpush1.msra.mxu0 0.0
    %1532 = vmatprep.subr.mxu0 0.0
    %1533 = vmatpush1.msra.mxu0 0.0
    %1534 = vmatprep.subr.mxu0 0.0
    %1535 = vmatpush1.msra.mxu0 0.0
    %1536 = vmatprep.subr.mxu0 0.0
    %1537 = vmatpush1.msra.mxu0 0.0
    %1538 = vmatprep.subr.mxu0 0.0
    %1539 = vmatpush1.msra.mxu0 0.0
    %1540 = vmatprep.subr.mxu0 0.0
    %1541 = vmatpush1.msra.mxu0 0.0
    %1542 = vmatprep.subr.mxu0 0.0
    %1543 = vmatpush1.msra.mxu0 0.0
    %1544 = vmatprep.subr.mxu0 0.0
    %1545 = vmatpush1.msra.mxu0 0.0
    %1546 = vmatprep.subr.mxu0 0.0
    %1547 = vmatpush1.msra.mxu0 0.0
    %1548 = vmatprep.subr.mxu0 0.0
    %1549 = vmatpush1.msra.mxu0 0.0
    %1550 = vmatprep.subr.mxu0 0.0
    %1551 = vmatpush1.msra.mxu0 0.0
    %1552 = vmatprep.subr.mxu0 0.0
    %1553 = vmatpush1.msra.mxu0 0.0
    %1554 = vmatprep.subr.mxu0 0.0
    %1555 = vmatpush1.msra.mxu0 0.0
    %1556 = vmatprep.subr.mxu0 0.0
    %1557 = vmatpush1.msra.mxu0 0.0
    %1558 = vmatprep.subr.mxu0 0.0
    %1559 = vmatpush1.msra.mxu0 0.0
    %1560 = vmatprep.subr.mxu0 0.0
    %1561 = vmatpush1.msra.mxu0 0.0
    %1562 = vmatprep.subr.mxu0 0.0
    %1563 = vmatpush1.msra.mxu0 0.0
    %1564 = vmatprep.subr.mxu0 0.0
    %1565 = vmatpush1.msra.mxu0 0.0
    %1566 = vmatprep.subr.mxu0 0.0
    %1567 = vmatpush1.msra.mxu0 0.0
    %1568 = vmatprep.subr.mxu0 0.0
    %1569 = vmatpush1.msra.mxu0 0.0
    %1570 = vmatprep.mubr.f32.mxu0 0.0
    %1571 = vmatmul.mubr.f32.gmra.mrb[0].mxu0 %v1504
    %v1572 = vpop.f32.mrb[0].mxu0
    %v1573 = vadd.f32 0.0, %v1572
    %v1574 = vpop.f32.mrb[0].mxu0
    %1575 = vdwg.mxu0
    %1576 = vmatprep.subr.mxu0 0.0
    %1577 = vmatpush1.msra.mxu0 %v192
    %1578 = vmatprep.subr.mxu0 0.0
    %1579 = vmatpush1.msra.mxu0 %v193
    %1580 = vmatprep.subr.mxu0 0.0
    %1581 = vmatpush1.msra.mxu0 %v194
    %1582 = vmatprep.subr.mxu0 0.0
    %1583 = vmatpush1.msra.mxu0 %v195
    %1584 = vmatprep.subr.mxu0 0.0
    %1585 = vmatpush1.msra.mxu0 0.0
    %1586 = vmatprep.subr.mxu0 0.0
    %1587 = vmatpush1.msra.mxu0 0.0
    %1588 = vmatprep.subr.mxu0 0.0
    %1589 = vmatpush1.msra.mxu0 0.0
    %1590 = vmatprep.subr.mxu0 0.0
    %1591 = vmatpush1.msra.mxu0 0.0
    %1592 = vmatprep.subr.mxu0 0.0
    %1593 = vmatpush1.msra.mxu0 0.0
    %1594 = vmatprep.subr.mxu0 0.0
    %1595 = vmatpush1.msra.mxu0 0.0
    %1596 = vmatprep.subr.mxu0 0.0
    %1597 = vmatpush1.msra.mxu0 0.0
    %1598 = vmatprep.subr.mxu0 0.0
    %1599 = vmatpush1.msra.mxu0 0.0
    %1600 = vmatprep.subr.mxu0 0.0
    %1601 = vmatpush1.msra.mxu0 0.0
    %1602 = vmatprep.subr.mxu0 0.0
    %1603 = vmatpush1.msra.mxu0 0.0
    %1604 = vmatprep.subr.mxu0 0.0
    %1605 = vmatpush1.msra.mxu0 0.0
    %1606 = vmatprep.subr.mxu0 0.0
    %1607 = vmatpush1.msra.mxu0 0.0
    %1608 = vmatprep.subr.mxu0 0.0
    %1609 = vmatpush1.msra.mxu0 0.0
    %1610 = vmatprep.subr.mxu0 0.0
    %1611 = vmatpush1.msra.mxu0 0.0
    %1612 = vmatprep.subr.mxu0 0.0
    %1613 = vmatpush1.msra.mxu0 0.0
    %1614 = vmatprep.subr.mxu0 0.0
    %1615 = vmatpush1.msra.mxu0 0.0
    %1616 = vmatprep.subr.mxu0 0.0
    %1617 = vmatpush1.msra.mxu0 0.0
    %1618 = vmatprep.subr.mxu0 0.0
    %1619 = vmatpush1.msra.mxu0 0.0
    %1620 = vmatprep.subr.mxu0 0.0
    %1621 = vmatpush1.msra.mxu0 0.0
    %1622 = vmatprep.subr.mxu0 0.0
    %1623 = vmatpush1.msra.mxu0 0.0
    %1624 = vmatprep.subr.mxu0 0.0
    %1625 = vmatpush1.msra.mxu0 0.0
    %1626 = vmatprep.subr.mxu0 0.0
    %1627 = vmatpush1.msra.mxu0 0.0
    %1628 = vmatprep.subr.mxu0 0.0
    %1629 = vmatpush1.msra.mxu0 0.0
    %1630 = vmatprep.subr.mxu0 0.0
    %1631 = vmatpush1.msra.mxu0 0.0
    %1632 = vmatprep.subr.mxu0 0.0
    %1633 = vmatpush1.msra.mxu0 0.0
    %1634 = vmatprep.subr.mxu0 0.0
    %1635 = vmatpush1.msra.mxu0 0.0
    %1636 = vmatprep.subr.mxu0 0.0
    %1637 = vmatpush1.msra.mxu0 0.0
    %1638 = vmatprep.subr.mxu0 0.0
    %1639 = vmatpush1.msra.mxu0 0.0
    %1640 = vmatprep.mubr.f32.mxu0 0.0
    %1641 = vmatmul.mubr.f32.gmra.mrb[0].mxu0 %v1406
    %v1642 = vpop.f32.mrb[0].mxu0
    %v1643 = vadd.f32 %v1573, %v1642
    %v1644 = vpop.f32.mrb[0].mxu0
    %1645 = vdwg.mxu0
    %v1646 = vadd.f32 %v1643, %v544
    %v1647 = vxor.u32 %v1646, 2147483648
    %v1648 = vmul.f32 %v1647, 1.442695
    %v1649 = vpow.pop %v1648
    %v1650 = vadd.f32 %v1649, 1.0
    %v1651 = vrcp.pop %v1650
    %v1652 = vmul.f32 1.0, %v1651
    %v1653 = vmul.f32 %v23, %v1652
    %v1654 = vadd.f32 %v1653, %v24
    %v1655 = vmul.f32 %v1654, %v1390
    %1657 = vrot.lane.b32.xlu0 %v1654, 64
    %v1658 = vpop.permute.xlu0 %1657
    %v1660 = vmul.f32 %v1654, %v1658
    %1662 = vrot.lane.b32.xlu0 %v1660, 32
    %v1663 = vpop.permute.xlu0 %1662
    %v1665 = vadd.f32 %v1655, %v1663
    %v1666 = vtanh.pop %v1665
    %1668 = vrot.lane.b32.xlu0 %v1666, 64
    %v1669 = vpop.permute.xlu0 %1668
    %v1671 = vmul.f32 %v1654, %v1669
    %1673 = vrot.lane.b32.xlu0 %v1671, 32
    %v1674 = vpop.permute.xlu0 %1673
    %1676 = vst.msk [vmem:[#allocation3 + $0x20] sm:$0xff] %vm44, %v1674
    %v1677 = vld [vmem:[#allocation2 + $0x30] sm:$0xff]
    %1679 = vrot.lane.b32.xlu0 %v1503, 32
    %v1680 = vpop.permute.xlu0 %1679
    %v1681 = vsel %vm44, %v1680, 0
    %1683 = vmatprep.subr.mxu0 0.0
    %1684 = vmatpush1.msra.mxu0 %v182
    %1685 = vmatprep.subr.mxu0 0.0
    %1686 = vmatpush1.msra.mxu0 %v183
    %1687 = vmatprep.subr.mxu0 0.0
    %1688 = vmatpush1.msra.mxu0 %v184
    %1689 = vmatprep.subr.mxu0 0.0
    %1690 = vmatpush1.msra.mxu0 %v185
    %1691 = vmatprep.subr.mxu0 0.0
    %1692 = vmatpush1.msra.mxu0 0.0
    %1693 = vmatprep.subr.mxu0 0.0
    %1694 = vmatpush1.msra.mxu0 0.0
    %1695 = vmatprep.subr.mxu0 0.0
    %1696 = vmatpush1.msra.mxu0 0.0
    %1697 = vmatprep.subr.mxu0 0.0
    %1698 = vmatpush1.msra.mxu0 0.0
    %1699 = vmatprep.subr.mxu0 0.0
    %1700 = vmatpush1.msra.mxu0 0.0
    %1701 = vmatprep.subr.mxu0 0.0
    %1702 = vmatpush1.msra.mxu0 0.0
    %1703 = vmatprep.subr.mxu0 0.0
    %1704 = vmatpush1.msra.mxu0 0.0
    %1705 = vmatprep.subr.mxu0 0.0
    %1706 = vmatpush1.msra.mxu0 0.0
    %1707 = vmatprep.subr.mxu0 0.0
    %1708 = vmatpush1.msra.mxu0 0.0
    %1709 = vmatprep.subr.mxu0 0.0
    %1710 = vmatpush1.msra.mxu0 0.0
    %1711 = vmatprep.subr.mxu0 0.0
    %1712 = vmatpush1.msra.mxu0 0.0
    %1713 = vmatprep.subr.mxu0 0.0
    %1714 = vmatpush1.msra.mxu0 0.0
    %1715 = vmatprep.subr.mxu0 0.0
    %1716 = vmatpush1.msra.mxu0 0.0
    %1717 = vmatprep.subr.mxu0 0.0
    %1718 = vmatpush1.msra.mxu0 0.0
    %1719 = vmatprep.subr.mxu0 0.0
    %1720 = vmatpush1.msra.mxu0 0.0
    %1721 = vmatprep.subr.mxu0 0.0
    %1722 = vmatpush1.msra.mxu0 0.0
    %1723 = vmatprep.subr.mxu0 0.0
    %1724 = vmatpush1.msra.mxu0 0.0
    %1725 = vmatprep.subr.mxu0 0.0
    %1726 = vmatpush1.msra.mxu0 0.0
    %1727 = vmatprep.subr.mxu0 0.0
    %1728 = vmatpush1.msra.mxu0 0.0
    %1729 = vmatprep.subr.mxu0 0.0
    %1730 = vmatpush1.msra.mxu0 0.0
    %1731 = vmatprep.subr.mxu0 0.0
    %1732 = vmatpush1.msra.mxu0 0.0
    %1733 = vmatprep.subr.mxu0 0.0
    %1734 = vmatpush1.msra.mxu0 0.0
    %1735 = vmatprep.subr.mxu0 0.0
    %1736 = vmatpush1.msra.mxu0 0.0
    %1737 = vmatprep.subr.mxu0 0.0
    %1738 = vmatpush1.msra.mxu0 0.0
    %1739 = vmatprep.subr.mxu0 0.0
    %1740 = vmatpush1.msra.mxu0 0.0
    %1741 = vmatprep.subr.mxu0 0.0
    %1742 = vmatpush1.msra.mxu0 0.0
    %1743 = vmatprep.subr.mxu0 0.0
    %1744 = vmatpush1.msra.mxu0 0.0
    %1745 = vmatprep.subr.mxu0 0.0
    %1746 = vmatpush1.msra.mxu0 0.0
    %1747 = vmatprep.mubr.f32.mxu0 0.0
    %1748 = vmatmul.mubr.f32.gmra.mrb[0].mxu0 %v1681
    %v1749 = vpop.f32.mrb[0].mxu0
    %v1750 = vadd.f32 0.0, %v1749
    %v1751 = vpop.f32.mrb[0].mxu0
    %1752 = vdwg.mxu0
    %v1753 = vadd.f32 %v1677, %v1750
    %v1754 = vxor.u32 %v1753, 2147483648
    %v1755 = vmul.f32 %v1754, 1.442695
    %v1756 = vpow.pop %v1755
    %v1757 = vadd.f32 %v1756, 1.0
    %v1758 = vrcp.pop %v1757
    %v1759 = vmul.f32 1.0, %v1758
    %v1760 = vmul.f32 %v23, %v1759
    %v1761 = vadd.f32 %v1760, %v24
    %v1762 = vmul.f32 %v1761, %v1497
    %1764 = vrot.lane.b32.xlu0 %v1761, 64
    %v1765 = vpop.permute.xlu0 %1764
    %v1767 = vmul.f32 %v1761, %v1765
    %1769 = vrot.lane.b32.xlu0 %v1767, 32
    %v1770 = vpop.permute.xlu0 %1769
    %v1772 = vadd.f32 %v1762, %v1770
    %v1773 = vtanh.pop %v1772
    %1775 = vrot.lane.b32.xlu0 %v1773, 64
    %v1776 = vpop.permute.xlu0 %1775
    %v1778 = vmul.f32 %v1761, %v1776
    %v1779 = vsel %vm44, %v1674, 0
    %1781 = vmatprep.subr.mxu0 0.0
    %1782 = vmatpush1.msra.mxu0 %v187
    %1783 = vmatprep.subr.mxu0 0.0
    %1784 = vmatpush1.msra.mxu0 %v188
    %1785 = vmatprep.subr.mxu0 0.0
    %1786 = vmatpush1.msra.mxu0 %v189
    %1787 = vmatprep.subr.mxu0 0.0
    %1788 = vmatpush1.msra.mxu0 %v190
    %1789 = vmatprep.subr.mxu0 0.0
    %1790 = vmatpush1.msra.mxu0 0.0
    %1791 = vmatprep.subr.mxu0 0.0
    %1792 = vmatpush1.msra.mxu0 0.0
    %1793 = vmatprep.subr.mxu0 0.0
    %1794 = vmatpush1.msra.mxu0 0.0
    %1795 = vmatprep.subr.mxu0 0.0
    %1796 = vmatpush1.msra.mxu0 0.0
    %1797 = vmatprep.subr.mxu0 0.0
    %1798 = vmatpush1.msra.mxu0 0.0
    %1799 = vmatprep.subr.mxu0 0.0
    %1800 = vmatpush1.msra.mxu0 0.0
    %1801 = vmatprep.subr.mxu0 0.0
    %1802 = vmatpush1.msra.mxu0 0.0
    %1803 = vmatprep.subr.mxu0 0.0
    %1804 = vmatpush1.msra.mxu0 0.0
    %1805 = vmatprep.subr.mxu0 0.0
    %1806 = vmatpush1.msra.mxu0 0.0
    %1807 = vmatprep.subr.mxu0 0.0
    %1808 = vmatpush1.msra.mxu0 0.0
    %1809 = vmatprep.subr.mxu0 0.0
    %1810 = vmatpush1.msra.mxu0 0.0
    %1811 = vmatprep.subr.mxu0 0.0
    %1812 = vmatpush1.msra.mxu0 0.0
    %1813 = vmatprep.subr.mxu0 0.0
    %1814 = vmatpush1.msra.mxu0 0.0
    %1815 = vmatprep.subr.mxu0 0.0
    %1816 = vmatpush1.msra.mxu0 0.0
    %1817 = vmatprep.subr.mxu0 0.0
    %1818 = vmatpush1.msra.mxu0 0.0
    %1819 = vmatprep.subr.mxu0 0.0
    %1820 = vmatpush1.msra.mxu0 0.0
    %1821 = vmatprep.subr.mxu0 0.0
    %1822 = vmatpush1.msra.mxu0 0.0
    %1823 = vmatprep.subr.mxu0 0.0
    %1824 = vmatpush1.msra.mxu0 0.0
    %1825 = vmatprep.subr.mxu0 0.0
    %1826 = vmatpush1.msra.mxu0 0.0
    %1827 = vmatprep.subr.mxu0 0.0
    %1828 = vmatpush1.msra.mxu0 0.0
    %1829 = vmatprep.subr.mxu0 0.0
    %1830 = vmatpush1.msra.mxu0 0.0
    %1831 = vmatprep.subr.mxu0 0.0
    %1832 = vmatpush1.msra.mxu0 0.0
    %1833 = vmatprep.subr.mxu0 0.0
    %1834 = vmatpush1.msra.mxu0 0.0
    %1835 = vmatprep.subr.mxu0 0.0
    %1836 = vmatpush1.msra.mxu0 0.0
    %1837 = vmatprep.subr.mxu0 0.0
    %1838 = vmatpush1.msra.mxu0 0.0
    %1839 = vmatprep.subr.mxu0 0.0
    %1840 = vmatpush1.msra.mxu0 0.0
    %1841 = vmatprep.subr.mxu0 0.0
    %1842 = vmatpush1.msra.mxu0 0.0
    %1843 = vmatprep.subr.mxu0 0.0
    %1844 = vmatpush1.msra.mxu0 0.0
    %1845 = vmatprep.mubr.f32.mxu0 0.0
    %1846 = vmatmul.mubr.f32.gmra.mrb[0].mxu0 %v1779
    %v1847 = vpop.f32.mrb[0].mxu0
    %v1848 = vadd.f32 0.0, %v1847
    %v1849 = vpop.f32.mrb[0].mxu0
    %1850 = vdwg.mxu0
    %1851 = vmatprep.subr.mxu0 0.0
    %1852 = vmatpush1.msra.mxu0 %v192
    %1853 = vmatprep.subr.mxu0 0.0
    %1854 = vmatpush1.msra.mxu0 %v193
    %1855 = vmatprep.subr.mxu0 0.0
    %1856 = vmatpush1.msra.mxu0 %v194
    %1857 = vmatprep.subr.mxu0 0.0
    %1858 = vmatpush1.msra.mxu0 %v195
    %1859 = vmatprep.subr.mxu0 0.0
    %1860 = vmatpush1.msra.mxu0 0.0
    %1861 = vmatprep.subr.mxu0 0.0
    %1862 = vmatpush1.msra.mxu0 0.0
    %1863 = vmatprep.subr.mxu0 0.0
    %1864 = vmatpush1.msra.mxu0 0.0
    %1865 = vmatprep.subr.mxu0 0.0
    %1866 = vmatpush1.msra.mxu0 0.0
    %1867 = vmatprep.subr.mxu0 0.0
    %1868 = vmatpush1.msra.mxu0 0.0
    %1869 = vmatprep.subr.mxu0 0.0
    %1870 = vmatpush1.msra.mxu0 0.0
    %1871 = vmatprep.subr.mxu0 0.0
    %1872 = vmatpush1.msra.mxu0 0.0
    %1873 = vmatprep.subr.mxu0 0.0
    %1874 = vmatpush1.msra.mxu0 0.0
    %1875 = vmatprep.subr.mxu0 0.0
    %1876 = vmatpush1.msra.mxu0 0.0
    %1877 = vmatprep.subr.mxu0 0.0
    %1878 = vmatpush1.msra.mxu0 0.0
    %1879 = vmatprep.subr.mxu0 0.0
    %1880 = vmatpush1.msra.mxu0 0.0
    %1881 = vmatprep.subr.mxu0 0.0
    %1882 = vmatpush1.msra.mxu0 0.0
    %1883 = vmatprep.subr.mxu0 0.0
    %1884 = vmatpush1.msra.mxu0 0.0
    %1885 = vmatprep.subr.mxu0 0.0
    %1886 = vmatpush1.msra.mxu0 0.0
    %1887 = vmatprep.subr.mxu0 0.0
    %1888 = vmatpush1.msra.mxu0 0.0
    %1889 = vmatprep.subr.mxu0 0.0
    %1890 = vmatpush1.msra.mxu0 0.0
    %1891 = vmatprep.subr.mxu0 0.0
    %1892 = vmatpush1.msra.mxu0 0.0
    %1893 = vmatprep.subr.mxu0 0.0
    %1894 = vmatpush1.msra.mxu0 0.0
    %1895 = vmatprep.subr.mxu0 0.0
    %1896 = vmatpush1.msra.mxu0 0.0
    %1897 = vmatprep.subr.mxu0 0.0
    %1898 = vmatpush1.msra.mxu0 0.0
    %1899 = vmatprep.subr.mxu0 0.0
    %1900 = vmatpush1.msra.mxu0 0.0
    %1901 = vmatprep.subr.mxu0 0.0
    %1902 = vmatpush1.msra.mxu0 0.0
    %1903 = vmatprep.subr.mxu0 0.0
    %1904 = vmatpush1.msra.mxu0 0.0
    %1905 = vmatprep.subr.mxu0 0.0
    %1906 = vmatpush1.msra.mxu0 0.0
    %1907 = vmatprep.subr.mxu0 0.0
    %1908 = vmatpush1.msra.mxu0 0.0
    %1909 = vmatprep.subr.mxu0 0.0
    %1910 = vmatpush1.msra.mxu0 0.0
    %1911 = vmatprep.subr.mxu0 0.0
    %1912 = vmatpush1.msra.mxu0 0.0
    %1913 = vmatprep.subr.mxu0 0.0
    %1914 = vmatpush1.msra.mxu0 0.0
    %1915 = vmatprep.mubr.f32.mxu0 0.0
    %1916 = vmatmul.mubr.f32.gmra.mrb[0].mxu0 %v1681
    %v1917 = vpop.f32.mrb[0].mxu0
    %v1918 = vadd.f32 %v1848, %v1917
    %v1919 = vpop.f32.mrb[0].mxu0
    %1920 = vdwg.mxu0
    %v1921 = vadd.f32 %v1918, %v544
    %v1922 = vxor.u32 %v1921, 2147483648
    %v1923 = vmul.f32 %v1922, 1.442695
    %v1924 = vpow.pop %v1923
    %v1925 = vadd.f32 %v1924, 1.0
    %v1926 = vrcp.pop %v1925
    %v1927 = vmul.f32 1.0, %v1926
    %v1928 = vmul.f32 %v23, %v1927
    %v1929 = vadd.f32 %v1928, %v24
    %v1930 = vmul.f32 %v1929, %v1665
    %1932 = vrot.lane.b32.xlu0 %v1929, 64
    %v1933 = vpop.permute.xlu0 %1932
    %v1935 = vmul.f32 %v1929, %v1933
    %1937 = vrot.lane.b32.xlu0 %v1935, 32
    %v1938 = vpop.permute.xlu0 %1937
    %v1940 = vadd.f32 %v1930, %v1938
    %v1941 = vtanh.pop %v1940
    %1943 = vrot.lane.b32.xlu0 %v1941, 64
    %v1944 = vpop.permute.xlu0 %1943
    %v1946 = vmul.f32 %v1929, %v1944
    %1948 = vrot.lane.b32.xlu0 %v1946, 32
    %v1949 = vpop.permute.xlu0 %1948
    %1951 = vst.msk [vmem:[#allocation3 + $0x28] sm:$0xff] %vm44, %v1949
    %v1952 = vld [vmem:[#allocation2 + $0x38] sm:$0xff]
    %1954 = vrot.lane.b32.xlu0 %v1778, 32
    %v1955 = vpop.permute.xlu0 %1954
    %v1956 = vsel %vm44, %v1955, 0
    %1958 = vmatprep.subr.mxu0 0.0
    %1959 = vmatpush1.msra.mxu0 %v182
    %1960 = vmatprep.subr.mxu0 0.0
    %1961 = vmatpush1.msra.mxu0 %v183
    %1962 = vmatprep.subr.mxu0 0.0
    %1963 = vmatpush1.msra.mxu0 %v184
    %1964 = vmatprep.subr.mxu0 0.0
    %1965 = vmatpush1.msra.mxu0 %v185
    %1966 = vmatprep.subr.mxu0 0.0
    %1967 = vmatpush1.msra.mxu0 0.0
    %1968 = vmatprep.subr.mxu0 0.0
    %1969 = vmatpush1.msra.mxu0 0.0
    %1970 = vmatprep.subr.mxu0 0.0
    %1971 = vmatpush1.msra.mxu0 0.0
    %1972 = vmatprep.subr.mxu0 0.0
    %1973 = vmatpush1.msra.mxu0 0.0
    %1974 = vmatprep.subr.mxu0 0.0
    %1975 = vmatpush1.msra.mxu0 0.0
    %1976 = vmatprep.subr.mxu0 0.0
    %1977 = vmatpush1.msra.mxu0 0.0
    %1978 = vmatprep.subr.mxu0 0.0
    %1979 = vmatpush1.msra.mxu0 0.0
    %1980 = vmatprep.subr.mxu0 0.0
    %1981 = vmatpush1.msra.mxu0 0.0
    %1982 = vmatprep.subr.mxu0 0.0
    %1983 = vmatpush1.msra.mxu0 0.0
    %1984 = vmatprep.subr.mxu0 0.0
    %1985 = vmatpush1.msra.mxu0 0.0
    %1986 = vmatprep.subr.mxu0 0.0
    %1987 = vmatpush1.msra.mxu0 0.0
    %1988 = vmatprep.subr.mxu0 0.0
    %1989 = vmatpush1.msra.mxu0 0.0
    %1990 = vmatprep.subr.mxu0 0.0
    %1991 = vmatpush1.msra.mxu0 0.0
    %1992 = vmatprep.subr.mxu0 0.0
    %1993 = vmatpush1.msra.mxu0 0.0
    %1994 = vmatprep.subr.mxu0 0.0
    %1995 = vmatpush1.msra.mxu0 0.0
    %1996 = vmatprep.subr.mxu0 0.0
    %1997 = vmatpush1.msra.mxu0 0.0
    %1998 = vmatprep.subr.mxu0 0.0
    %1999 = vmatpush1.msra.mxu0 0.0
    %2000 = vmatprep.subr.mxu0 0.0
    %2001 = vmatpush1.msra.mxu0 0.0
    %2002 = vmatprep.subr.mxu0 0.0
    %2003 = vmatpush1.msra.mxu0 0.0
    %2004 = vmatprep.subr.mxu0 0.0
    %2005 = vmatpush1.msra.mxu0 0.0
    %2006 = vmatprep.subr.mxu0 0.0
    %2007 = vmatpush1.msra.mxu0 0.0
    %2008 = vmatprep.subr.mxu0 0.0
    %2009 = vmatpush1.msra.mxu0 0.0
    %2010 = vmatprep.subr.mxu0 0.0
    %2011 = vmatpush1.msra.mxu0 0.0
    %2012 = vmatprep.subr.mxu0 0.0
    %2013 = vmatpush1.msra.mxu0 0.0
    %2014 = vmatprep.subr.mxu0 0.0
    %2015 = vmatpush1.msra.mxu0 0.0
    %2016 = vmatprep.subr.mxu0 0.0
    %2017 = vmatpush1.msra.mxu0 0.0
    %2018 = vmatprep.subr.mxu0 0.0
    %2019 = vmatpush1.msra.mxu0 0.0
    %2020 = vmatprep.subr.mxu0 0.0
    %2021 = vmatpush1.msra.mxu0 0.0
    %2022 = vmatprep.mubr.f32.mxu0 0.0
    %2023 = vmatmul.mubr.f32.gmra.mrb[0].mxu0 %v1956
    %v2024 = vpop.f32.mrb[0].mxu0
    %v2025 = vadd.f32 0.0, %v2024
    %v2026 = vpop.f32.mrb[0].mxu0
    %2027 = vdwg.mxu0
    %v2028 = vadd.f32 %v1952, %v2025
    %v2029 = vxor.u32 %v2028, 2147483648
    %v2030 = vmul.f32 %v2029, 1.442695
    %v2031 = vpow.pop %v2030
    %v2032 = vadd.f32 %v2031, 1.0
    %v2033 = vrcp.pop %v2032
    %v2034 = vmul.f32 1.0, %v2033
    %v2035 = vmul.f32 %v23, %v2034
    %v2036 = vadd.f32 %v2035, %v24
    %v2037 = vmul.f32 %v2036, %v1772
    %2039 = vrot.lane.b32.xlu0 %v2036, 64
    %v2040 = vpop.permute.xlu0 %2039
    %v2042 = vmul.f32 %v2036, %v2040
    %2044 = vrot.lane.b32.xlu0 %v2042, 32
    %v2045 = vpop.permute.xlu0 %2044
    %v2047 = vadd.f32 %v2037, %v2045
    %v2048 = vtanh.pop %v2047
    %2050 = vrot.lane.b32.xlu0 %v2048, 64
    %v2051 = vpop.permute.xlu0 %2050
    %v2053 = vmul.f32 %v2036, %v2051
    %v2054 = vsel %vm44, %v1949, 0
    %2056 = vmatprep.subr.mxu0 0.0
    %2057 = vmatpush1.msra.mxu0 %v187
    %2058 = vmatprep.subr.mxu0 0.0
    %2059 = vmatpush1.msra.mxu0 %v188
    %2060 = vmatprep.subr.mxu0 0.0
    %2061 = vmatpush1.msra.mxu0 %v189
    %2062 = vmatprep.subr.mxu0 0.0
    %2063 = vmatpush1.msra.mxu0 %v190
    %2064 = vmatprep.subr.mxu0 0.0
    %2065 = vmatpush1.msra.mxu0 0.0
    %2066 = vmatprep.subr.mxu0 0.0
    %2067 = vmatpush1.msra.mxu0 0.0
    %2068 = vmatprep.subr.mxu0 0.0
    %2069 = vmatpush1.msra.mxu0 0.0
    %2070 = vmatprep.subr.mxu0 0.0
    %2071 = vmatpush1.msra.mxu0 0.0
    %2072 = vmatprep.subr.mxu0 0.0
    %2073 = vmatpush1.msra.mxu0 0.0
    %2074 = vmatprep.subr.mxu0 0.0
    %2075 = vmatpush1.msra.mxu0 0.0
    %2076 = vmatprep.subr.mxu0 0.0
    %2077 = vmatpush1.msra.mxu0 0.0
    %2078 = vmatprep.subr.mxu0 0.0
    %2079 = vmatpush1.msra.mxu0 0.0
    %2080 = vmatprep.subr.mxu0 0.0
    %2081 = vmatpush1.msra.mxu0 0.0
    %2082 = vmatprep.subr.mxu0 0.0
    %2083 = vmatpush1.msra.mxu0 0.0
    %2084 = vmatprep.subr.mxu0 0.0
    %2085 = vmatpush1.msra.mxu0 0.0
    %2086 = vmatprep.subr.mxu0 0.0
    %2087 = vmatpush1.msra.mxu0 0.0
    %2088 = vmatprep.subr.mxu0 0.0
    %2089 = vmatpush1.msra.mxu0 0.0
    %2090 = vmatprep.subr.mxu0 0.0
    %2091 = vmatpush1.msra.mxu0 0.0
    %2092 = vmatprep.subr.mxu0 0.0
    %2093 = vmatpush1.msra.mxu0 0.0
    %2094 = vmatprep.subr.mxu0 0.0
    %2095 = vmatpush1.msra.mxu0 0.0
    %2096 = vmatprep.subr.mxu0 0.0
    %2097 = vmatpush1.msra.mxu0 0.0
    %2098 = vmatprep.subr.mxu0 0.0
    %2099 = vmatpush1.msra.mxu0 0.0
    %2100 = vmatprep.subr.mxu0 0.0
    %2101 = vmatpush1.msra.mxu0 0.0
    %2102 = vmatprep.subr.mxu0 0.0
    %2103 = vmatpush1.msra.mxu0 0.0
    %2104 = vmatprep.subr.mxu0 0.0
    %2105 = vmatpush1.msra.mxu0 0.0
    %2106 = vmatprep.subr.mxu0 0.0
    %2107 = vmatpush1.msra.mxu0 0.0
    %2108 = vmatprep.subr.mxu0 0.0
    %2109 = vmatpush1.msra.mxu0 0.0
    %2110 = vmatprep.subr.mxu0 0.0
    %2111 = vmatpush1.msra.mxu0 0.0
    %2112 = vmatprep.subr.mxu0 0.0
    %2113 = vmatpush1.msra.mxu0 0.0
    %2114 = vmatprep.subr.mxu0 0.0
    %2115 = vmatpush1.msra.mxu0 0.0
    %2116 = vmatprep.subr.mxu0 0.0
    %2117 = vmatpush1.msra.mxu0 0.0
    %2118 = vmatprep.subr.mxu0 0.0
    %2119 = vmatpush1.msra.mxu0 0.0
    %2120 = vmatprep.mubr.f32.mxu0 0.0
    %2121 = vmatmul.mubr.f32.gmra.mrb[0].mxu0 %v2054
    %v2122 = vpop.f32.mrb[0].mxu0
    %v2123 = vadd.f32 0.0, %v2122
    %v2124 = vpop.f32.mrb[0].mxu0
    %2125 = vdwg.mxu0
    %2126 = vmatprep.subr.mxu0 0.0
    %2127 = vmatpush1.msra.mxu0 %v192
    %2128 = vmatprep.subr.mxu0 0.0
    %2129 = vmatpush1.msra.mxu0 %v193
    %2130 = vmatprep.subr.mxu0 0.0
    %2131 = vmatpush1.msra.mxu0 %v194
    %2132 = vmatprep.subr.mxu0 0.0
    %2133 = vmatpush1.msra.mxu0 %v195
    %2134 = vmatprep.subr.mxu0 0.0
    %2135 = vmatpush1.msra.mxu0 0.0
    %2136 = vmatprep.subr.mxu0 0.0
    %2137 = vmatpush1.msra.mxu0 0.0
    %2138 = vmatprep.subr.mxu0 0.0
    %2139 = vmatpush1.msra.mxu0 0.0
    %2140 = vmatprep.subr.mxu0 0.0
    %2141 = vmatpush1.msra.mxu0 0.0
    %2142 = vmatprep.subr.mxu0 0.0
    %2143 = vmatpush1.msra.mxu0 0.0
    %2144 = vmatprep.subr.mxu0 0.0
    %2145 = vmatpush1.msra.mxu0 0.0
    %2146 = vmatprep.subr.mxu0 0.0
    %2147 = vmatpush1.msra.mxu0 0.0
    %2148 = vmatprep.subr.mxu0 0.0
    %2149 = vmatpush1.msra.mxu0 0.0
    %2150 = vmatprep.subr.mxu0 0.0
    %2151 = vmatpush1.msra.mxu0 0.0
    %2152 = vmatprep.subr.mxu0 0.0
    %2153 = vmatpush1.msra.mxu0 0.0
    %2154 = vmatprep.subr.mxu0 0.0
    %2155 = vmatpush1.msra.mxu0 0.0
    %2156 = vmatprep.subr.mxu0 0.0
    %2157 = vmatpush1.msra.mxu0 0.0
    %2158 = vmatprep.subr.mxu0 0.0
    %2159 = vmatpush1.msra.mxu0 0.0
    %2160 = vmatprep.subr.mxu0 0.0
    %2161 = vmatpush1.msra.mxu0 0.0
    %2162 = vmatprep.subr.mxu0 0.0
    %2163 = vmatpush1.msra.mxu0 0.0
    %2164 = vmatprep.subr.mxu0 0.0
    %2165 = vmatpush1.msra.mxu0 0.0
    %2166 = vmatprep.subr.mxu0 0.0
    %2167 = vmatpush1.msra.mxu0 0.0
    %2168 = vmatprep.subr.mxu0 0.0
    %2169 = vmatpush1.msra.mxu0 0.0
    %2170 = vmatprep.subr.mxu0 0.0
    %2171 = vmatpush1.msra.mxu0 0.0
    %2172 = vmatprep.subr.mxu0 0.0
    %2173 = vmatpush1.msra.mxu0 0.0
    %2174 = vmatprep.subr.mxu0 0.0
    %2175 = vmatpush1.msra.mxu0 0.0
    %2176 = vmatprep.subr.mxu0 0.0
    %2177 = vmatpush1.msra.mxu0 0.0
    %2178 = vmatprep.subr.mxu0 0.0
    %2179 = vmatpush1.msra.mxu0 0.0
    %2180 = vmatprep.subr.mxu0 0.0
    %2181 = vmatpush1.msra.mxu0 0.0
    %2182 = vmatprep.subr.mxu0 0.0
    %2183 = vmatpush1.msra.mxu0 0.0
    %2184 = vmatprep.subr.mxu0 0.0
    %2185 = vmatpush1.msra.mxu0 0.0
    %2186 = vmatprep.subr.mxu0 0.0
    %2187 = vmatpush1.msra.mxu0 0.0
    %2188 = vmatprep.subr.mxu0 0.0
    %2189 = vmatpush1.msra.mxu0 0.0
    %2190 = vmatprep.mubr.f32.mxu0 0.0
    %2191 = vmatmul.mubr.f32.gmra.mrb[0].mxu0 %v1956
    %v2192 = vpop.f32.mrb[0].mxu0
    %v2193 = vadd.f32 %v2123, %v2192
    %v2194 = vpop.f32.mrb[0].mxu0
    %2195 = vdwg.mxu0
    %v2196 = vadd.f32 %v2193, %v544
    %v2197 = vxor.u32 %v2196, 2147483648
    %v2198 = vmul.f32 %v2197, 1.442695
    %v2199 = vpow.pop %v2198
    %v2200 = vadd.f32 %v2199, 1.0
    %v2201 = vrcp.pop %v2200
    %v2202 = vmul.f32 1.0, %v2201
    %v2203 = vmul.f32 %v23, %v2202
    %v2204 = vadd.f32 %v2203, %v24
    %v2205 = vmul.f32 %v2204, %v1940
    %2207 = vrot.lane.b32.xlu0 %v2204, 64
    %v2208 = vpop.permute.xlu0 %2207
    %v2210 = vmul.f32 %v2204, %v2208
    %2212 = vrot.lane.b32.xlu0 %v2210, 32
    %v2213 = vpop.permute.xlu0 %2212
    %v2215 = vadd.f32 %v2205, %v2213
    %v2216 = vtanh.pop %v2215
    %2218 = vrot.lane.b32.xlu0 %v2216, 64
    %v2219 = vpop.permute.xlu0 %2218
    %v2221 = vmul.f32 %v2204, %v2219
    %2223 = vrot.lane.b32.xlu0 %v2221, 32
    %v2224 = vpop.permute.xlu0 %2223
    %2226 = vst.msk [vmem:[#allocation3 + $0x30] sm:$0xff] %vm44, %v2224
    %v2227 = vsel %vm44, %v2224, 0
    %2229 = vmatprep.subr.mxu0 0.0
    %2230 = vmatpush1.msra.mxu0 %v187
    %2231 = vmatprep.subr.mxu0 0.0
    %2232 = vmatpush1.msra.mxu0 %v188
    %2233 = vmatprep.subr.mxu0 0.0
    %2234 = vmatpush1.msra.mxu0 %v189
    %2235 = vmatprep.subr.mxu0 0.0
    %2236 = vmatpush1.msra.mxu0 %v190
    %2237 = vmatprep.subr.mxu0 0.0
    %2238 = vmatpush1.msra.mxu0 0.0
    %2239 = vmatprep.subr.mxu0 0.0
    %2240 = vmatpush1.msra.mxu0 0.0
    %2241 = vmatprep.subr.mxu0 0.0
    %2242 = vmatpush1.msra.mxu0 0.0
    %2243 = vmatprep.subr.mxu0 0.0
    %2244 = vmatpush1.msra.mxu0 0.0
    %2245 = vmatprep.subr.mxu0 0.0
    %2246 = vmatpush1.msra.mxu0 0.0
    %2247 = vmatprep.subr.mxu0 0.0
    %2248 = vmatpush1.msra.mxu0 0.0
    %2249 = vmatprep.subr.mxu0 0.0
    %2250 = vmatpush1.msra.mxu0 0.0
    %2251 = vmatprep.subr.mxu0 0.0
    %2252 = vmatpush1.msra.mxu0 0.0
    %2253 = vmatprep.subr.mxu0 0.0
    %2254 = vmatpush1.msra.mxu0 0.0
    %2255 = vmatprep.subr.mxu0 0.0
    %2256 = vmatpush1.msra.mxu0 0.0
    %2257 = vmatprep.subr.mxu0 0.0
    %2258 = vmatpush1.msra.mxu0 0.0
    %2259 = vmatprep.subr.mxu0 0.0
    %2260 = vmatpush1.msra.mxu0 0.0
    %2261 = vmatprep.subr.mxu0 0.0
    %2262 = vmatpush1.msra.mxu0 0.0
    %2263 = vmatprep.subr.mxu0 0.0
    %2264 = vmatpush1.msra.mxu0 0.0
    %2265 = vmatprep.subr.mxu0 0.0
    %2266 = vmatpush1.msra.mxu0 0.0
    %2267 = vmatprep.subr.mxu0 0.0
    %2268 = vmatpush1.msra.mxu0 0.0
    %2269 = vmatprep.subr.mxu0 0.0
    %2270 = vmatpush1.msra.mxu0 0.0
    %2271 = vmatprep.subr.mxu0 0.0
    %2272 = vmatpush1.msra.mxu0 0.0
    %2273 = vmatprep.subr.mxu0 0.0
    %2274 = vmatpush1.msra.mxu0 0.0
    %2275 = vmatprep.subr.mxu0 0.0
    %2276 = vmatpush1.msra.mxu0 0.0
    %2277 = vmatprep.subr.mxu0 0.0
    %2278 = vmatpush1.msra.mxu0 0.0
    %2279 = vmatprep.subr.mxu0 0.0
    %2280 = vmatpush1.msra.mxu0 0.0
    %2281 = vmatprep.subr.mxu0 0.0
    %2282 = vmatpush1.msra.mxu0 0.0
    %2283 = vmatprep.subr.mxu0 0.0
    %2284 = vmatpush1.msra.mxu0 0.0
    %2285 = vmatprep.subr.mxu0 0.0
    %2286 = vmatpush1.msra.mxu0 0.0
    %2287 = vmatprep.subr.mxu0 0.0
    %2288 = vmatpush1.msra.mxu0 0.0
    %2289 = vmatprep.subr.mxu0 0.0
    %2290 = vmatpush1.msra.mxu0 0.0
    %2291 = vmatprep.subr.mxu0 0.0
    %2292 = vmatpush1.msra.mxu0 0.0
    %2293 = vmatprep.mubr.f32.mxu0 0.0
    %2294 = vmatmul.mubr.f32.gmra.mrb[0].mxu0 %v2227
    %v2295 = vpop.f32.mrb[0].mxu0
    %v2296 = vadd.f32 0.0, %v2295
    %v2297 = vpop.f32.mrb[0].mxu0
    %2298 = vdwg.mxu0
    %2300 = vrot.lane.b32.xlu0 %v2053, 32
    %v2301 = vpop.permute.xlu0 %2300
    %v2302 = vsel %vm44, %v2301, 0
    %2304 = vmatprep.subr.mxu0 0.0
    %2305 = vmatpush1.msra.mxu0 %v192
    %2306 = vmatprep.subr.mxu0 0.0
    %2307 = vmatpush1.msra.mxu0 %v193
    %2308 = vmatprep.subr.mxu0 0.0
    %2309 = vmatpush1.msra.mxu0 %v194
    %2310 = vmatprep.subr.mxu0 0.0
    %2311 = vmatpush1.msra.mxu0 %v195
    %2312 = vmatprep.subr.mxu0 0.0
    %2313 = vmatpush1.msra.mxu0 0.0
    %2314 = vmatprep.subr.mxu0 0.0
    %2315 = vmatpush1.msra.mxu0 0.0
    %2316 = vmatprep.subr.mxu0 0.0
    %2317 = vmatpush1.msra.mxu0 0.0
    %2318 = vmatprep.subr.mxu0 0.0
    %2319 = vmatpush1.msra.mxu0 0.0
    %2320 = vmatprep.subr.mxu0 0.0
    %2321 = vmatpush1.msra.mxu0 0.0
    %2322 = vmatprep.subr.mxu0 0.0
    %2323 = vmatpush1.msra.mxu0 0.0
    %2324 = vmatprep.subr.mxu0 0.0
    %2325 = vmatpush1.msra.mxu0 0.0
    %2326 = vmatprep.subr.mxu0 0.0
    %2327 = vmatpush1.msra.mxu0 0.0
    %2328 = vmatprep.subr.mxu0 0.0
    %2329 = vmatpush1.msra.mxu0 0.0
    %2330 = vmatprep.subr.mxu0 0.0
    %2331 = vmatpush1.msra.mxu0 0.0
    %2332 = vmatprep.subr.mxu0 0.0
    %2333 = vmatpush1.msra.mxu0 0.0
    %2334 = vmatprep.subr.mxu0 0.0
    %2335 = vmatpush1.msra.mxu0 0.0
    %2336 = vmatprep.subr.mxu0 0.0
    %2337 = vmatpush1.msra.mxu0 0.0
    %2338 = vmatprep.subr.mxu0 0.0
    %2339 = vmatpush1.msra.mxu0 0.0
    %2340 = vmatprep.subr.mxu0 0.0
    %2341 = vmatpush1.msra.mxu0 0.0
    %2342 = vmatprep.subr.mxu0 0.0
    %2343 = vmatpush1.msra.mxu0 0.0
    %2344 = vmatprep.subr.mxu0 0.0
    %2345 = vmatpush1.msra.mxu0 0.0
    %2346 = vmatprep.subr.mxu0 0.0
    %2347 = vmatpush1.msra.mxu0 0.0
    %2348 = vmatprep.subr.mxu0 0.0
    %2349 = vmatpush1.msra.mxu0 0.0
    %2350 = vmatprep.subr.mxu0 0.0
    %2351 = vmatpush1.msra.mxu0 0.0
    %2352 = vmatprep.subr.mxu0 0.0
    %2353 = vmatpush1.msra.mxu0 0.0
    %2354 = vmatprep.subr.mxu0 0.0
    %2355 = vmatpush1.msra.mxu0 0.0
    %2356 = vmatprep.subr.mxu0 0.0
    %2357 = vmatpush1.msra.mxu0 0.0
    %2358 = vmatprep.subr.mxu0 0.0
    %2359 = vmatpush1.msra.mxu0 0.0
    %2360 = vmatprep.subr.mxu0 0.0
    %2361 = vmatpush1.msra.mxu0 0.0
    %2362 = vmatprep.subr.mxu0 0.0
    %2363 = vmatpush1.msra.mxu0 0.0
    %2364 = vmatprep.subr.mxu0 0.0
    %2365 = vmatpush1.msra.mxu0 0.0
    %2366 = vmatprep.subr.mxu0 0.0
    %2367 = vmatpush1.msra.mxu0 0.0
    %2368 = vmatprep.mubr.f32.mxu0 0.0
    %2369 = vmatmul.mubr.f32.gmra.mrb[0].mxu0 %v2302
    %v2370 = vpop.f32.mrb[0].mxu0
    %v2371 = vadd.f32 %v2296, %v2370
    %v2372 = vpop.f32.mrb[0].mxu0
    %2373 = vdwg.mxu0
    %v2374 = vadd.f32 %v2371, %v544
    %v2375 = vxor.u32 %v2374, 2147483648
    %v2376 = vmul.f32 %v2375, 1.442695
    %v2377 = vpow.pop %v2376
    %v2378 = vadd.f32 %v2377, 1.0
    %v2379 = vrcp.pop %v2378
    %v2380 = vmul.f32 1.0, %v2379
    %v2381 = vmul.f32 %v23, %v2380
    %v2382 = vadd.f32 %v2381, %v24
    %v2383 = vmul.f32 %v2382, %v2215
    %2385 = vrot.lane.b32.xlu0 %v2382, 64
    %v2386 = vpop.permute.xlu0 %2385
    %v2388 = vmul.f32 %v2382, %v2386
    %2390 = vrot.lane.b32.xlu0 %v2388, 32
    %v2391 = vpop.permute.xlu0 %2390
    %v2393 = vadd.f32 %v2383, %v2391
    %v2394 = vtanh.pop %v2393
    %2396 = vrot.lane.b32.xlu0 %v2394, 64
    %v2397 = vpop.permute.xlu0 %2396
    %v2399 = vmul.f32 %v2382, %v2397
    %2401 = vrot.lane.b32.xlu0 %v2399, 32
    %v2402 = vpop.permute.xlu0 %2401
    %2404 = vst.msk [vmem:[#allocation3 + $0x38] sm:$0xff] %vm44, %v2402
    // Predicated region
    $region18: #{_encoder_pallas.1} parent=1 // pred_check
      _
    $region19: #{_encoder_pallas.1} parent=1 // pred_check_branch
      %2406 = sbr.rel (0) target = $region21
    $region20: #{_encoder_pallas.1} parent=1 // pred_region
      %s2408 = ssub.s32 1024, 1024
      %2409 = vsyncadd [#allocation4], %s2408
      %s2410 = sshll.u32 [#allocation3], 4
      %s2411 = int_to_ptr.vmem [resolvable:$true] %s2410
      %2416 = dma.vmem_to_hbm [thread:$0]  %s2411, 1024, %s4, [#allocation4], 128, 128, 8
    $region21: #{_encoder_pallas.1} parent=1 // pred_fallthru
      _
    // Predicated region
    $region22: #{_encoder_pallas.1} parent=1 // pred_check
      _
    $region23: #{_encoder_pallas.1} parent=1 // pred_check_branch
      %2418 = sbr.rel (0) target = $region25
    $region24: #{_encoder_pallas.1} parent=1 // pred_region
      %2419 = dma.done [#allocation4], 1024
    $region25: #{_encoder_pallas.1} parent=1 // pred_fallthru
      _
    %2420 = vsyncpa [#allocation4], 1

</llo_original>
